<compile_context>
chip_gen: v5e
topology: v5e:2x2
jax: 0.10.0
libtpu: 0.0.40
codegen_flags: <defaults>
</compile_context>

<pallas_src>
import functools

import jax
import jax.numpy as jnp
from jax.experimental import pallas as pl

KP = 8                 # embedding contraction dim: input_dim=3 zero-padded to 8
ROWS_PER_LAYER = 8     # rows per layer in the packed f32 params blob


# ----------------------------------------------------------------------------- helpers
def _layer_norm(x, g, b, eps=1e-5):
    mu = jnp.mean(x, axis=-1, keepdims=True)
    var = jnp.mean((x - mu) ** 2, axis=-1, keepdims=True)
    return (x - mu) * jax.lax.rsqrt(var + eps) * g + b


def _bf16_matmul(a, b):
    return jnp.dot(a.astype(jnp.bfloat16), b.astype(jnp.bfloat16),
                   preferred_element_type=jnp.float32)


def _bf16_einsum(eq, a, b):
    return jnp.einsum(eq, a.astype(jnp.bfloat16), b.astype(jnp.bfloat16),
                      preferred_element_type=jnp.float32)


# ----------------------------------------------------------------------------- fused kernel
def lighting_encoder_kernel(x_ref, we_ref, w2_ref, fp_ref, o_ref, *,
                            num_heads, group_mod):
    """Fused embedding + L x TransformerEncoderLayer (post-norm, relu, eval mode).

    Operands (all whole-array, VMEM-resident, no grid):
      x_ref  : [M, KP]            f32   B-major flatten of [B, N, 3], zero padded to KP
      we_ref : [L, E, 3E + E + F] bf16  per layer [ wq|wk|wv | wo | w1 ]  (row dim = E)
      w2_ref : [L, F, E]          bf16  per layer FFN down-projection
      fp_ref : [1+KP+8L, W]       f32   row 0: eb; rows 1..KP: emb_w; then per layer
                                        bqkv | bo | b1 | b2 | g1 | be1 | g2 | be2
      o_ref  : [M, E]             f32
    """
    M = x_ref.shape[0]
    L, E, _ = we_ref.shape
    F = w2_ref.shape[1]
    H = num_heads
    D = E // H
    scale = float(D) ** -0.5
    bf16, f32 = jnp.bfloat16, jnp.float32

    # ---- embedding: bf16 MXU matmul (same precision policy as the reference) -----------
    ew = fp_ref[1:1 + KP, 0:E].astype(bf16)                         # [KP, E]
    eb = fp_ref[0:1, 0:E]                                           # [1, E]
    x = jnp.dot(x_ref[...].astype(bf16), ew,
                preferred_element_type=f32) + eb                    # [M, E] f32

    # ---- block-diagonal attention mask (batch_first=False semantics) -------------------
    # rows r = b*N + n; attention mixes rows sharing the same n = r % N.  Built in-kernel
    # from two iotas (one-off VPU ops): a 5th operand would cost one more entry DMA, which
    # is exactly the overhead this kernel is bound by.
    ri = jax.lax.broadcasted_iota(jnp.int32, (M, M), 0) % group_mod
    ci = jax.lax.broadcasted_iota(jnp.int32, (M, M), 1) % group_mod
    mask_bias = jnp.where(ri == ci, 0.0, -1e30).astype(f32)         # [M, M]

    for l in range(L):                                              # static unroll over layers
        base = 1 + KP + l * ROWS_PER_LAYER
        bqkv = fp_ref[base + 0:base + 1, 0:3 * E]
        bo = fp_ref[base + 1:base + 2, 0:E]
        b1 = fp_ref[base + 2:base + 3, 0:F]
        b2 = fp_ref[base + 3:base + 4, 0:E]
        g1 = fp_ref[base + 4:base + 5, 0:E]
        be1 = fp_ref[base + 5:base + 6, 0:E]
        g2 = fp_ref[base + 6:base + 7, 0:E]
        be2 = fp_ref[base + 7:base + 8, 0:E]

        wqkv = we_ref[l, :, 0:3 * E]                                # [E, 3E] bf16
        wo_l = we_ref[l, :, 3 * E:4 * E]                            # [E, E]
        w1_l = we_ref[l, :, 4 * E:4 * E + F]                        # [E, F]
        w2_l = w2_ref[l]                                            # [F, E]

        # ---- fused QKV: one lane-dense [M,E]@[E,3E] matmul ------------------------------
        qkv = jnp.dot(x.astype(bf16), wqkv,
                      preferred_element_type=f32) + bqkv            # [M, 3E] f32
        qkvb = qkv.astype(bf16)

        # ---- per-head attention (scores/ctx matmuls are inherently per-head) ------------
        # NOTE: 1/sqrt(D) stays an f32 multiply on [M,M]=[16,16] scores (not folded into
        # bf16 wq) and softmax keeps max-subtraction + exact divide -> numerically matches
        # the reference path; the cost is a couple of VPU ops on one tiny tile.
        ctx_parts = []
        for h in range(H):
            qh = qkvb[:, h * D:(h + 1) * D]                         # [M, D]
            kh = qkvb[:, E + h * D:E + (h + 1) * D]
            vh = qkvb[:, 2 * E + h * D:2 * E + (h + 1) * D]
            s = jax.lax.dot_general(qh, kh, (((1,), (1,)), ((), ())),
                                    preferred_element_type=f32)     # q @ k^T : [M, M]
            s = s * scale + mask_bias
            s = s - jnp.max(s, axis=-1, keepdims=True)
            p = jnp.exp(s)
            p = p / jnp.sum(p, axis=-1, keepdims=True)              # exact normalization
            ctx_parts.append(jnp.dot(p.astype(bf16), vh,
                                     preferred_element_type=f32))   # [M, D] f32
        ctx = jnp.concatenate(ctx_parts, axis=-1).astype(bf16)      # [M, E] head-interleaved

        # ---- output projection: single [M,E]@[E,E]; head-sum happens in the MXU ---------
        attn = jnp.dot(ctx, wo_l, preferred_element_type=f32) + bo  # [M, E]

        # ---- post-norm residual + FFN (relu); dropout = eval-mode identity --------------
        x = _layer_norm(x + attn, g1, be1)
        h1 = jnp.maximum(jnp.dot(x.astype(bf16), w1_l,
                                 preferred_element_type=f32) + b1, 0.0)
        h2 = jnp.dot(h1.astype(bf16), w2_l, preferred_element_type=f32) + b2
        x = _layer_norm(x + h2, g2, be2)

    o_ref[...] = x                                                  # [M, E] lane-dense


# ----------------------------------------------------------------------------- packing / wrapper
def pack_params(params, num_heads):
    """Pack all weights into 3 buffers (2 bf16 + 1 f32) -> 3 kernel-entry DMAs."""
    del num_heads  # head split happens inside the kernel via static lane slicing
    emb_w, emb_b = params["emb_w"], params["emb_b"]
    C, E = emb_w.shape
    layers = params["layers"]
    F = layers[0]["w1"].shape[1]
    W = max(3 * E, F)
    bf16 = jnp.bfloat16

    we = jnp.stack([jnp.concatenate(
        [lp["wq"], lp["wk"], lp["wv"], lp["wo"], lp["w1"]], axis=1)
        for lp in layers]).astype(bf16)                             # [L, E, 4E+F]
    w2 = jnp.stack([lp["w2"] for lp in layers]).astype(bf16)        # [L, F, E]

    def row(v):
        v = jnp.asarray(v, jnp.float32).reshape(1, -1)
        return jnp.pad(v, ((0, 0), (0, W - v.shape[1])))

    ew_pad = jnp.pad(emb_w, ((0, KP - C), (0, 0)))                  # [KP, E]
    rows = [row(emb_b)] + [row(ew_pad[i]) for i in range(KP)]
    for lp in layers:
        rows += [row(jnp.concatenate([lp["bq"], lp["bk"], lp["bv"]], axis=1)),
                 row(lp["bo"]), row(lp["b1"]), row(lp["b2"]),
                 row(lp["g1"]), row(lp["be1"]), row(lp["g2"]), row(lp["be2"])]
    fp = jnp.concatenate(rows, axis=0)                              # [1+KP+8L, W]
    return {"we": we, "w2": w2, "fp": fp}


def lighting_encoder_forward(x, packed, *, num_heads):
    """x: [B, N, 3] -> [B, N, embed_dim]  (same contract as LightingEncoder.forward)."""
    B, N, C = x.shape
    we, w2, fp = packed["we"], packed["w2"], packed["fp"]
    L, E, _ = we.shape
    F = w2.shape[1]
    H, D = num_heads, E // num_heads
    M = B * N
    xp = jnp.pad(x.reshape(M, C), ((0, 0), (0, KP - C)))            # tiny [M, KP] input pad

    flops = int(L * (2 * M * E * 3 * E + 4 * H * M * M * D + 2 * M * E * E
                     + 4 * M * E * F) + 2 * M * KP * E)
    cost = pl.CostEstimate(
        flops=flops,
        transcendentals=int(L * H * M * M),
        bytes_accessed=int(xp.size * 4 + we.size * 2 + w2.size * 2
                           + fp.size * 4 + M * E * 4))

    out = pl.pallas_call(
        functools.partial(lighting_encoder_kernel, num_heads=num_heads, group_mod=N),
        out_shape=jax.ShapeDtypeStruct((M, E), jnp.float32),
        cost_estimate=cost,
        # No grid / BlockSpecs: single invocation, every operand is a whole-array block
        # fully resident in VMEM (<1 MiB total, fine on v5e/v6e/v7x defaults).
    )(xp, we, w2, fp)
    return out.reshape(B, N, E)


# ----------------------------------------------------------------------------- params / reference
def init_params(key, input_dim, embed_dim, num_heads, num_layers, ff_dim):
    keys = jax.random.split(key, 2 + num_layers)

    def dense(k, fan_in, shape):
        return jax.random.normal(k, shape, jnp.float32) / jnp.sqrt(jnp.float32(fan_in))

    params = {
        "emb_w": dense(keys[0], input_dim, (input_dim, embed_dim)),
        "emb_b": 0.01 * jax.random.normal(keys[1], (1, embed_dim), jnp.float32),
        "layers": [],
    }
    E, F = embed_dim, ff_dim
    for l in range(num_layers):
        lk = jax.random.split(keys[2 + l], 8)
        params["layers"].append({
            "wq": dense(lk[0], E, (E, E)), "wk": dense(lk[1], E, (E, E)),
            "wv": dense(lk[2], E, (E, E)),
            "bq": jnp.zeros((1, E), jnp.float32), "bk": jnp.zeros((1, E), jnp.float32),
            "bv": jnp.zeros((1, E), jnp.float32),
            "wo": dense(lk[3], E, (E, E)),
            "bo": 0.01 * jax.random.normal(lk[4], (1, E), jnp.float32),
            "g1": jnp.ones((1, E), jnp.float32), "be1": jnp.zeros((1, E), jnp.float32),
            "w1": dense(lk[5], E, (E, F)),
            "b1": 0.01 * jax.random.normal(lk[6], (1, F), jnp.float32),
            "w2": dense(lk[7], F, (F, E)), "b2": jnp.zeros((1, E), jnp.float32),
            "g2": jnp.ones((1, E), jnp.float32), "be2": jnp.zeros((1, E), jnp.float32),
        })
    return params


def reference_forward(x, params, num_heads):
    """Pure-JAX reference (PyTorch eval semantics, batch_first=False) mirroring the kernel's
    precision policy (bf16 matmul inputs, f32 accumulate, exact softmax)."""
    B, N, C = x.shape
    E = params["emb_w"].shape[1]
    H, D = num_heads, E // num_heads
    scale = float(D) ** -0.5
    h = _bf16_matmul(x.reshape(B * N, C), params["emb_w"]) + params["emb_b"]
    xt = jnp.transpose(h.reshape(B, N, E), (1, 0, 2))               # [N, B, E]; seq axis = B
    Nb, S, _ = xt.shape
    for lp in params["layers"]:
        x2 = xt.reshape(Nb * S, E)
        q = (_bf16_matmul(x2, lp["wq"]) + lp["bq"]).reshape(Nb, S, H, D)
        k = (_bf16_matmul(x2, lp["wk"]) + lp["bk"]).reshape(Nb, S, H, D)
        v = (_bf16_matmul(x2, lp["wv"]) + lp["bv"]).reshape(Nb, S, H, D)
        s = _bf16_einsum("nshd,nthd->nhst", q, k) * scale
        p = jax.nn.softmax(s, axis=-1)
        ctx = _bf16_einsum("nhst,nthd->nshd", p, v).reshape(Nb * S, E)
        attn = _bf16_matmul(ctx, lp["wo"]) + lp["bo"]
        y = _layer_norm(x2 + attn, lp["g1"], lp["be1"])
        ff = _bf16_matmul(jnp.maximum(_bf16_matmul(y, lp["w1"]) + lp["b1"], 0.0),
                          lp["w2"]) + lp["b2"]
        xt = _layer_norm(y + ff, lp["g2"], lp["be2"]).reshape(Nb, S, E)
    return jnp.transpose(xt, (1, 0, 2))                             # [B, N, E]


# ----------------------------------------------------------------------------- main
if __name__ == "__main__":
    key = jax.random.PRNGKey(0)
    B, N, C = 2, 8, 3                       # x: [batch, len(cuedata), 3]
    embed_dim, num_heads, num_layers, ff_dim = 128, 4, 2, 256

    pkey, xkey = jax.random.split(key)
    params = init_params(pkey, C, embed_dim, num_heads, num_layers, ff_dim)
    packed = pack_params(params, num_heads)
    x = jax.random.normal(xkey, (B, N, C), jnp.float32)

    fwd = jax.jit(functools.partial(lighting_encoder_forward, num_heads=num_heads))
    out = jax.block_until_ready(fwd(x, packed))
    assert out.shape == (B, N, embed_dim), out.shape

    ref = reference_forward(x, params, num_heads)
    err = float(jnp.max(jnp.abs(out - ref)))
    assert bool(jnp.allclose(out, ref, atol=1e-2, rtol=1e-2)), err

    print("KERNEL_OK")
</pallas_src>

<mosaic_0001>
module attributes {stable_mosaic.version = 11 : i64} {
  func.func @lighting_encoder_kernel(%arg0: memref<16x8xf32, #tpu.memory_space<vmem>>, %arg1: memref<2x128x768xbf16, #tpu.memory_space<vmem>>, %arg2: memref<2x256x128xbf16, #tpu.memory_space<vmem>>, %arg3: memref<25x384xf32, #tpu.memory_space<vmem>>, %arg4: memref<16x128xf32, #tpu.memory_space<vmem>>) attributes {dimension_semantics = [], scalar_prefetch = 0 : i64, scratch_operands = 0 : i64, tpu.core_type = #tpu.core_type<tc>} {
    %c1 = arith.constant 1 : index
    %c0 = arith.constant 0 : index
    %0 = vector.load %arg3[%c1, %c0] : memref<25x384xf32, #tpu.memory_space<vmem>>, vector<8x128xf32>
    %1 = arith.truncf %0 : vector<8x128xf32> to vector<8x128xbf16>
    %c0_0 = arith.constant 0 : index
    %c0_1 = arith.constant 0 : index
    %2 = vector.load %arg3[%c0_0, %c0_1] : memref<25x384xf32, #tpu.memory_space<vmem>>, vector<1x128xf32>
    %c0_2 = arith.constant 0 : index
    %c0_3 = arith.constant 0 : index
    %3 = vector.load %arg0[%c0_2, %c0_3] : memref<16x8xf32, #tpu.memory_space<vmem>>, vector<16x8xf32>
    %4 = arith.truncf %3 : vector<16x8xf32> to vector<16x8xbf16>
    %cst = arith.constant dense<0.000000e+00> : vector<16x128xf32>
    %5 = tpu.matmul %4, %1, %cst {dimension_numbers = #tpu.dot_dimension_numbers<[1], [0], [0], [1], [0, 0, 1, 1], [], []>} : vector<16x8xbf16>, vector<8x128xbf16>, vector<16x128xf32> -> vector<16x128xf32>
    %6 = vector.broadcast %2 : vector<1x128xf32> to vector<16x128xf32>
    %7 = arith.addf %5, %6 : vector<16x128xf32>
    %8 = tpu.iota {dimensions = array<i32: 0>} : vector<16x16xi32>
    %c8_i32 = arith.constant 8 : i32
    %c0_i32 = arith.constant 0 : i32
    %9 = arith.cmpi eq, %c8_i32, %c0_i32 : i32
    %c1_i32 = arith.constant 1 : i32
    %10 = arith.select %9, %c1_i32, %c8_i32 : i32
    %11 = vector.broadcast %10 : i32 to vector<16x16xi32>
    %12 = arith.remsi %8, %11 : vector<16x16xi32>
    %c0_i32_4 = arith.constant 0 : i32
    %13 = vector.broadcast %c0_i32_4 : i32 to vector<16x16xi32>
    %14 = arith.cmpi ne, %12, %13 : vector<16x16xi32>
    %c0_i32_5 = arith.constant 0 : i32
    %15 = vector.broadcast %c0_i32_5 : i32 to vector<16x16xi32>
    %16 = arith.cmpi slt, %12, %15 : vector<16x16xi32>
    %c0_i32_6 = arith.constant 0 : i32
    %17 = arith.cmpi slt, %10, %c0_i32_6 : i32
    %18 = vector.broadcast %17 : i1 to vector<16x16xi1>
    %19 = vector.broadcast %18 : vector<16x16xi1> to vector<16x16xi1>
    %20 = arith.xori %16, %19 : vector<16x16xi1>
    %21 = arith.andi %20, %14 : vector<16x16xi1>
    %22 = vector.broadcast %10 : i32 to vector<16x16xi32>
    %23 = arith.addi %12, %22 : vector<16x16xi32>
    %24 = arith.select %21, %23, %12 : vector<16x16xi1>, vector<16x16xi32>
    %25 = tpu.iota {dimensions = array<i32: 1>} : vector<16x16xi32>
    %c8_i32_7 = arith.constant 8 : i32
    %c0_i32_8 = arith.constant 0 : i32
    %26 = arith.cmpi eq, %c8_i32_7, %c0_i32_8 : i32
    %c1_i32_9 = arith.constant 1 : i32
    %27 = arith.select %26, %c1_i32_9, %c8_i32_7 : i32
    %28 = vector.broadcast %27 : i32 to vector<16x16xi32>
    %29 = arith.remsi %25, %28 : vector<16x16xi32>
    %c0_i32_10 = arith.constant 0 : i32
    %30 = vector.broadcast %c0_i32_10 : i32 to vector<16x16xi32>
    %31 = arith.cmpi ne, %29, %30 : vector<16x16xi32>
    %c0_i32_11 = arith.constant 0 : i32
    %32 = vector.broadcast %c0_i32_11 : i32 to vector<16x16xi32>
    %33 = arith.cmpi slt, %29, %32 : vector<16x16xi32>
    %c0_i32_12 = arith.constant 0 : i32
    %34 = arith.cmpi slt, %27, %c0_i32_12 : i32
    %35 = vector.broadcast %34 : i1 to vector<16x16xi1>
    %36 = vector.broadcast %35 : vector<16x16xi1> to vector<16x16xi1>
    %37 = arith.xori %33, %36 : vector<16x16xi1>
    %38 = arith.andi %37, %31 : vector<16x16xi1>
    %39 = vector.broadcast %27 : i32 to vector<16x16xi32>
    %40 = arith.addi %29, %39 : vector<16x16xi32>
    %41 = arith.select %38, %40, %29 : vector<16x16xi1>, vector<16x16xi32>
    %42 = arith.cmpi eq, %24, %41 : vector<16x16xi32>
    %cst_13 = arith.constant 0.000000e+00 : f32
    %cst_14 = arith.constant -1.000000e+30 : f32
    %43 = vector.broadcast %cst_13 : f32 to vector<16x16xf32>
    %44 = vector.broadcast %cst_14 : f32 to vector<16x16xf32>
    %45 = arith.select %42, %43, %44 : vector<16x16xi1>, vector<16x16xf32>
    %c9 = arith.constant 9 : index
    %c0_15 = arith.constant 0 : index
    %46 = vector.load %arg3[%c9, %c0_15] : memref<25x384xf32, #tpu.memory_space<vmem>>, vector<1x384xf32>
    %c10 = arith.constant 10 : index
    %c0_16 = arith.constant 0 : index
    %47 = vector.load %arg3[%c10, %c0_16] : memref<25x384xf32, #tpu.memory_space<vmem>>, vector<1x128xf32>
    %c11 = arith.constant 11 : index
    %c0_17 = arith.constant 0 : index
    %48 = vector.load %arg3[%c11, %c0_17] : memref<25x384xf32, #tpu.memory_space<vmem>>, vector<1x256xf32>
    %c12 = arith.constant 12 : index
    %c0_18 = arith.constant 0 : index
    %49 = vector.load %arg3[%c12, %c0_18] : memref<25x384xf32, #tpu.memory_space<vmem>>, vector<1x128xf32>
    %c13 = arith.constant 13 : index
    %c0_19 = arith.constant 0 : index
    %50 = vector.load %arg3[%c13, %c0_19] : memref<25x384xf32, #tpu.memory_space<vmem>>, vector<1x128xf32>
    %c14 = arith.constant 14 : index
    %c0_20 = arith.constant 0 : index
    %51 = vector.load %arg3[%c14, %c0_20] : memref<25x384xf32, #tpu.memory_space<vmem>>, vector<1x128xf32>
    %c15 = arith.constant 15 : index
    %c0_21 = arith.constant 0 : index
    %52 = vector.load %arg3[%c15, %c0_21] : memref<25x384xf32, #tpu.memory_space<vmem>>, vector<1x128xf32>
    %c16 = arith.constant 16 : index
    %c0_22 = arith.constant 0 : index
    %53 = vector.load %arg3[%c16, %c0_22] : memref<25x384xf32, #tpu.memory_space<vmem>>, vector<1x128xf32>
    %c0_23 = arith.constant 0 : index
    %c0_24 = arith.constant 0 : index
    %c0_25 = arith.constant 0 : index
    %54 = vector.load %arg1[%c0_23, %c0_24, %c0_25] : memref<2x128x768xbf16, #tpu.memory_space<vmem>>, vector<1x128x384xbf16>
    %55 = vector.shape_cast %54 : vector<1x128x384xbf16> to vector<128x384xbf16>
    %c0_26 = arith.constant 0 : index
    %c0_27 = arith.constant 0 : index
    %c384 = arith.constant 384 : index
    %56 = vector.load %arg1[%c0_26, %c0_27, %c384] : memref<2x128x768xbf16, #tpu.memory_space<vmem>>, vector<1x128x128xbf16>
    %57 = vector.shape_cast %56 : vector<1x128x128xbf16> to vector<128x128xbf16>
    %c0_28 = arith.constant 0 : index
    %c0_29 = arith.constant 0 : index
    %c512 = arith.constant 512 : index
    %58 = vector.load %arg1[%c0_28, %c0_29, %c512] : memref<2x128x768xbf16, #tpu.memory_space<vmem>>, vector<1x128x256xbf16>
    %59 = vector.shape_cast %58 : vector<1x128x256xbf16> to vector<128x256xbf16>
    %c0_30 = arith.constant 0 : index
    %c0_31 = arith.constant 0 : index
    %c0_32 = arith.constant 0 : index
    %60 = vector.load %arg2[%c0_30, %c0_31, %c0_32] : memref<2x256x128xbf16, #tpu.memory_space<vmem>>, vector<1x256x128xbf16>
    %61 = vector.shape_cast %60 : vector<1x256x128xbf16> to vector<256x128xbf16>
    %62 = arith.truncf %7 : vector<16x128xf32> to vector<16x128xbf16>
    %cst_33 = arith.constant dense<0.000000e+00> : vector<16x384xf32>
    %63 = tpu.matmul %62, %55, %cst_33 {dimension_numbers = #tpu.dot_dimension_numbers<[1], [0], [0], [1], [0, 0, 1, 1], [], []>} : vector<16x128xbf16>, vector<128x384xbf16>, vector<16x384xf32> -> vector<16x384xf32>
    %64 = vector.broadcast %46 : vector<1x384xf32> to vector<16x384xf32>
    %65 = arith.addf %63, %64 : vector<16x384xf32>
    %66 = arith.truncf %65 : vector<16x384xf32> to vector<16x384xbf16>
    %67 = vector.extract_strided_slice %66 {offsets = [0, 0], sizes = [16, 32], strides = [1, 1]} : vector<16x384xbf16> to vector<16x32xbf16>
    %68 = vector.extract_strided_slice %66 {offsets = [0, 128], sizes = [16, 32], strides = [1, 1]} : vector<16x384xbf16> to vector<16x32xbf16>
    %69 = vector.extract_strided_slice %66 {offsets = [0, 256], sizes = [16, 32], strides = [1, 1]} : vector<16x384xbf16> to vector<16x32xbf16>
    %cst_34 = arith.constant dense<0.000000e+00> : vector<16x16xf32>
    %70 = tpu.matmul %67, %68, %cst_34 {dimension_numbers = #tpu.dot_dimension_numbers<[1], [1], [0], [0], [0, 0, 1, 0], [], []>} : vector<16x32xbf16>, vector<16x32xbf16>, vector<16x16xf32> -> vector<16x16xf32>
    %cst_35 = arith.constant 0.176776692 : f32
    %71 = vector.broadcast %cst_35 : f32 to vector<16x16xf32>
    %72 = arith.mulf %70, %71 : vector<16x16xf32>
    %73 = arith.addf %72, %45 : vector<16x16xf32>
    %cst_36 = arith.constant dense<0xFF800000> : vector<16xf32>
    %74 = vector.multi_reduction <maximumf>, %73, %cst_36 [1] : vector<16x16xf32> to vector<16xf32>
    %75 = vector.shape_cast %74 : vector<16xf32> to vector<16x1xf32>
    %76 = vector.broadcast %75 : vector<16x1xf32> to vector<16x16xf32>
    %77 = arith.subf %73, %76 : vector<16x16xf32>
    %78 = math.exp %77 : vector<16x16xf32>
    %cst_37 = arith.constant dense<0.000000e+00> : vector<16xf32>
    %79 = vector.multi_reduction <add>, %78, %cst_37 [1] : vector<16x16xf32> to vector<16xf32>
    %80 = vector.shape_cast %79 : vector<16xf32> to vector<16x1xf32>
    %81 = vector.broadcast %80 : vector<16x1xf32> to vector<16x16xf32>
    %82 = arith.divf %78, %81 : vector<16x16xf32>
    %83 = arith.truncf %82 : vector<16x16xf32> to vector<16x16xbf16>
    %cst_38 = arith.constant dense<0.000000e+00> : vector<16x32xf32>
    %84 = tpu.matmul %83, %69, %cst_38 {dimension_numbers = #tpu.dot_dimension_numbers<[1], [0], [0], [1], [0, 0, 1, 1], [], []>} : vector<16x16xbf16>, vector<16x32xbf16>, vector<16x32xf32> -> vector<16x32xf32>
    %85 = vector.extract_strided_slice %66 {offsets = [0, 32], sizes = [16, 32], strides = [1, 1]} : vector<16x384xbf16> to vector<16x32xbf16>
    %86 = vector.extract_strided_slice %66 {offsets = [0, 160], sizes = [16, 32], strides = [1, 1]} : vector<16x384xbf16> to vector<16x32xbf16>
    %87 = vector.extract_strided_slice %66 {offsets = [0, 288], sizes = [16, 32], strides = [1, 1]} : vector<16x384xbf16> to vector<16x32xbf16>
    %cst_39 = arith.constant dense<0.000000e+00> : vector<16x16xf32>
    %88 = tpu.matmul %85, %86, %cst_39 {dimension_numbers = #tpu.dot_dimension_numbers<[1], [1], [0], [0], [0, 0, 1, 0], [], []>} : vector<16x32xbf16>, vector<16x32xbf16>, vector<16x16xf32> -> vector<16x16xf32>
    %cst_40 = arith.constant 0.176776692 : f32
    %89 = vector.broadcast %cst_40 : f32 to vector<16x16xf32>
    %90 = arith.mulf %88, %89 : vector<16x16xf32>
    %91 = arith.addf %90, %45 : vector<16x16xf32>
    %cst_41 = arith.constant dense<0xFF800000> : vector<16xf32>
    %92 = vector.multi_reduction <maximumf>, %91, %cst_41 [1] : vector<16x16xf32> to vector<16xf32>
    %93 = vector.shape_cast %92 : vector<16xf32> to vector<16x1xf32>
    %94 = vector.broadcast %93 : vector<16x1xf32> to vector<16x16xf32>
    %95 = arith.subf %91, %94 : vector<16x16xf32>
    %96 = math.exp %95 : vector<16x16xf32>
    %cst_42 = arith.constant dense<0.000000e+00> : vector<16xf32>
    %97 = vector.multi_reduction <add>, %96, %cst_42 [1] : vector<16x16xf32> to vector<16xf32>
    %98 = vector.shape_cast %97 : vector<16xf32> to vector<16x1xf32>
    %99 = vector.broadcast %98 : vector<16x1xf32> to vector<16x16xf32>
    %100 = arith.divf %96, %99 : vector<16x16xf32>
    %101 = arith.truncf %100 : vector<16x16xf32> to vector<16x16xbf16>
    %cst_43 = arith.constant dense<0.000000e+00> : vector<16x32xf32>
    %102 = tpu.matmul %101, %87, %cst_43 {dimension_numbers = #tpu.dot_dimension_numbers<[1], [0], [0], [1], [0, 0, 1, 1], [], []>} : vector<16x16xbf16>, vector<16x32xbf16>, vector<16x32xf32> -> vector<16x32xf32>
    %103 = vector.extract_strided_slice %66 {offsets = [0, 64], sizes = [16, 32], strides = [1, 1]} : vector<16x384xbf16> to vector<16x32xbf16>
    %104 = vector.extract_strided_slice %66 {offsets = [0, 192], sizes = [16, 32], strides = [1, 1]} : vector<16x384xbf16> to vector<16x32xbf16>
    %105 = vector.extract_strided_slice %66 {offsets = [0, 320], sizes = [16, 32], strides = [1, 1]} : vector<16x384xbf16> to vector<16x32xbf16>
    %cst_44 = arith.constant dense<0.000000e+00> : vector<16x16xf32>
    %106 = tpu.matmul %103, %104, %cst_44 {dimension_numbers = #tpu.dot_dimension_numbers<[1], [1], [0], [0], [0, 0, 1, 0], [], []>} : vector<16x32xbf16>, vector<16x32xbf16>, vector<16x16xf32> -> vector<16x16xf32>
    %cst_45 = arith.constant 0.176776692 : f32
    %107 = vector.broadcast %cst_45 : f32 to vector<16x16xf32>
    %108 = arith.mulf %106, %107 : vector<16x16xf32>
    %109 = arith.addf %108, %45 : vector<16x16xf32>
    %cst_46 = arith.constant dense<0xFF800000> : vector<16xf32>
    %110 = vector.multi_reduction <maximumf>, %109, %cst_46 [1] : vector<16x16xf32> to vector<16xf32>
    %111 = vector.shape_cast %110 : vector<16xf32> to vector<16x1xf32>
    %112 = vector.broadcast %111 : vector<16x1xf32> to vector<16x16xf32>
    %113 = arith.subf %109, %112 : vector<16x16xf32>
    %114 = math.exp %113 : vector<16x16xf32>
    %cst_47 = arith.constant dense<0.000000e+00> : vector<16xf32>
    %115 = vector.multi_reduction <add>, %114, %cst_47 [1] : vector<16x16xf32> to vector<16xf32>
    %116 = vector.shape_cast %115 : vector<16xf32> to vector<16x1xf32>
    %117 = vector.broadcast %116 : vector<16x1xf32> to vector<16x16xf32>
    %118 = arith.divf %114, %117 : vector<16x16xf32>
    %119 = arith.truncf %118 : vector<16x16xf32> to vector<16x16xbf16>
    %cst_48 = arith.constant dense<0.000000e+00> : vector<16x32xf32>
    %120 = tpu.matmul %119, %105, %cst_48 {dimension_numbers = #tpu.dot_dimension_numbers<[1], [0], [0], [1], [0, 0, 1, 1], [], []>} : vector<16x16xbf16>, vector<16x32xbf16>, vector<16x32xf32> -> vector<16x32xf32>
    %121 = vector.extract_strided_slice %66 {offsets = [0, 96], sizes = [16, 32], strides = [1, 1]} : vector<16x384xbf16> to vector<16x32xbf16>
    %122 = vector.extract_strided_slice %66 {offsets = [0, 224], sizes = [16, 32], strides = [1, 1]} : vector<16x384xbf16> to vector<16x32xbf16>
    %123 = vector.extract_strided_slice %66 {offsets = [0, 352], sizes = [16, 32], strides = [1, 1]} : vector<16x384xbf16> to vector<16x32xbf16>
    %cst_49 = arith.constant dense<0.000000e+00> : vector<16x16xf32>
    %124 = tpu.matmul %121, %122, %cst_49 {dimension_numbers = #tpu.dot_dimension_numbers<[1], [1], [0], [0], [0, 0, 1, 0], [], []>} : vector<16x32xbf16>, vector<16x32xbf16>, vector<16x16xf32> -> vector<16x16xf32>
    %cst_50 = arith.constant 0.176776692 : f32
    %125 = vector.broadcast %cst_50 : f32 to vector<16x16xf32>
    %126 = arith.mulf %124, %125 : vector<16x16xf32>
    %127 = arith.addf %126, %45 : vector<16x16xf32>
    %cst_51 = arith.constant dense<0xFF800000> : vector<16xf32>
    %128 = vector.multi_reduction <maximumf>, %127, %cst_51 [1] : vector<16x16xf32> to vector<16xf32>
    %129 = vector.shape_cast %128 : vector<16xf32> to vector<16x1xf32>
    %130 = vector.broadcast %129 : vector<16x1xf32> to vector<16x16xf32>
    %131 = arith.subf %127, %130 : vector<16x16xf32>
    %132 = math.exp %131 : vector<16x16xf32>
    %cst_52 = arith.constant dense<0.000000e+00> : vector<16xf32>
    %133 = vector.multi_reduction <add>, %132, %cst_52 [1] : vector<16x16xf32> to vector<16xf32>
    %134 = vector.shape_cast %133 : vector<16xf32> to vector<16x1xf32>
    %135 = vector.broadcast %134 : vector<16x1xf32> to vector<16x16xf32>
    %136 = arith.divf %132, %135 : vector<16x16xf32>
    %137 = arith.truncf %136 : vector<16x16xf32> to vector<16x16xbf16>
    %cst_53 = arith.constant dense<0.000000e+00> : vector<16x32xf32>
    %138 = tpu.matmul %137, %123, %cst_53 {dimension_numbers = #tpu.dot_dimension_numbers<[1], [0], [0], [1], [0, 0, 1, 1], [], []>} : vector<16x16xbf16>, vector<16x32xbf16>, vector<16x32xf32> -> vector<16x32xf32>
    %139 = tpu.concatenate %84, %102, %120, %138 in 1 : vector<16x32xf32>, vector<16x32xf32>, vector<16x32xf32>, vector<16x32xf32> -> vector<16x128xf32>
    %140 = arith.truncf %139 : vector<16x128xf32> to vector<16x128xbf16>
    %cst_54 = arith.constant dense<0.000000e+00> : vector<16x128xf32>
    %141 = tpu.matmul %140, %57, %cst_54 {dimension_numbers = #tpu.dot_dimension_numbers<[1], [0], [0], [1], [0, 0, 1, 1], [], []>} : vector<16x128xbf16>, vector<128x128xbf16>, vector<16x128xf32> -> vector<16x128xf32>
    %142 = vector.broadcast %47 : vector<1x128xf32> to vector<16x128xf32>
    %143 = arith.addf %141, %142 : vector<16x128xf32>
    %144 = arith.addf %7, %143 : vector<16x128xf32>
    %cst_55 = arith.constant dense<0.000000e+00> : vector<16xf32>
    %145 = vector.multi_reduction <add>, %144, %cst_55 [1] : vector<16x128xf32> to vector<16xf32>
    %146 = vector.shape_cast %145 : vector<16xf32> to vector<16x1xf32>
    %cst_56 = arith.constant 1.280000e+02 : f32
    %147 = vector.broadcast %cst_56 : f32 to vector<16x1xf32>
    %148 = arith.divf %146, %147 : vector<16x1xf32>
    %149 = vector.broadcast %148 : vector<16x1xf32> to vector<16x128xf32>
    %150 = arith.subf %144, %149 : vector<16x128xf32>
    %151 = arith.mulf %150, %150 : vector<16x128xf32>
    %cst_57 = arith.constant dense<0.000000e+00> : vector<16xf32>
    %152 = vector.multi_reduction <add>, %151, %cst_57 [1] : vector<16x128xf32> to vector<16xf32>
    %153 = vector.shape_cast %152 : vector<16xf32> to vector<16x1xf32>
    %cst_58 = arith.constant 1.280000e+02 : f32
    %154 = vector.broadcast %cst_58 : f32 to vector<16x1xf32>
    %155 = arith.divf %153, %154 : vector<16x1xf32>
    %156 = vector.broadcast %148 : vector<16x1xf32> to vector<16x128xf32>
    %157 = arith.subf %144, %156 : vector<16x128xf32>
    %cst_59 = arith.constant 9.99999974E-6 : f32
    %158 = vector.broadcast %cst_59 : f32 to vector<16x1xf32>
    %159 = arith.addf %155, %158 : vector<16x1xf32>
    %160 = math.rsqrt %159 : vector<16x1xf32>
    %161 = vector.broadcast %160 : vector<16x1xf32> to vector<16x128xf32>
    %162 = arith.mulf %157, %161 : vector<16x128xf32>
    %163 = vector.broadcast %50 : vector<1x128xf32> to vector<16x128xf32>
    %164 = arith.mulf %162, %163 : vector<16x128xf32>
    %165 = vector.broadcast %51 : vector<1x128xf32> to vector<16x128xf32>
    %166 = arith.addf %164, %165 : vector<16x128xf32>
    %167 = arith.truncf %166 : vector<16x128xf32> to vector<16x128xbf16>
    %cst_60 = arith.constant dense<0.000000e+00> : vector<16x256xf32>
    %168 = tpu.matmul %167, %59, %cst_60 {dimension_numbers = #tpu.dot_dimension_numbers<[1], [0], [0], [1], [0, 0, 1, 1], [], []>} : vector<16x128xbf16>, vector<128x256xbf16>, vector<16x256xf32> -> vector<16x256xf32>
    %169 = vector.broadcast %48 : vector<1x256xf32> to vector<16x256xf32>
    %170 = arith.addf %168, %169 : vector<16x256xf32>
    %cst_61 = arith.constant 0.000000e+00 : f32
    %171 = vector.broadcast %cst_61 : f32 to vector<16x256xf32>
    %172 = arith.maximumf %170, %171 : vector<16x256xf32>
    %173 = arith.truncf %172 : vector<16x256xf32> to vector<16x256xbf16>
    %cst_62 = arith.constant dense<0.000000e+00> : vector<16x128xf32>
    %174 = tpu.matmul %173, %61, %cst_62 {dimension_numbers = #tpu.dot_dimension_numbers<[1], [0], [0], [1], [0, 0, 1, 1], [], []>} : vector<16x256xbf16>, vector<256x128xbf16>, vector<16x128xf32> -> vector<16x128xf32>
    %175 = vector.broadcast %49 : vector<1x128xf32> to vector<16x128xf32>
    %176 = arith.addf %174, %175 : vector<16x128xf32>
    %177 = arith.addf %166, %176 : vector<16x128xf32>
    %cst_63 = arith.constant dense<0.000000e+00> : vector<16xf32>
    %178 = vector.multi_reduction <add>, %177, %cst_63 [1] : vector<16x128xf32> to vector<16xf32>
    %179 = vector.shape_cast %178 : vector<16xf32> to vector<16x1xf32>
    %cst_64 = arith.constant 1.280000e+02 : f32
    %180 = vector.broadcast %cst_64 : f32 to vector<16x1xf32>
    %181 = arith.divf %179, %180 : vector<16x1xf32>
    %182 = vector.broadcast %181 : vector<16x1xf32> to vector<16x128xf32>
    %183 = arith.subf %177, %182 : vector<16x128xf32>
    %184 = arith.mulf %183, %183 : vector<16x128xf32>
    %cst_65 = arith.constant dense<0.000000e+00> : vector<16xf32>
    %185 = vector.multi_reduction <add>, %184, %cst_65 [1] : vector<16x128xf32> to vector<16xf32>
    %186 = vector.shape_cast %185 : vector<16xf32> to vector<16x1xf32>
    %cst_66 = arith.constant 1.280000e+02 : f32
    %187 = vector.broadcast %cst_66 : f32 to vector<16x1xf32>
    %188 = arith.divf %186, %187 : vector<16x1xf32>
    %189 = vector.broadcast %181 : vector<16x1xf32> to vector<16x128xf32>
    %190 = arith.subf %177, %189 : vector<16x128xf32>
    %cst_67 = arith.constant 9.99999974E-6 : f32
    %191 = vector.broadcast %cst_67 : f32 to vector<16x1xf32>
    %192 = arith.addf %188, %191 : vector<16x1xf32>
    %193 = math.rsqrt %192 : vector<16x1xf32>
    %194 = vector.broadcast %193 : vector<16x1xf32> to vector<16x128xf32>
    %195 = arith.mulf %190, %194 : vector<16x128xf32>
    %196 = vector.broadcast %52 : vector<1x128xf32> to vector<16x128xf32>
    %197 = arith.mulf %195, %196 : vector<16x128xf32>
    %198 = vector.broadcast %53 : vector<1x128xf32> to vector<16x128xf32>
    %199 = arith.addf %197, %198 : vector<16x128xf32>
    %c17 = arith.constant 17 : index
    %c0_68 = arith.constant 0 : index
    %200 = vector.load %arg3[%c17, %c0_68] : memref<25x384xf32, #tpu.memory_space<vmem>>, vector<1x384xf32>
    %c18 = arith.constant 18 : index
    %c0_69 = arith.constant 0 : index
    %201 = vector.load %arg3[%c18, %c0_69] : memref<25x384xf32, #tpu.memory_space<vmem>>, vector<1x128xf32>
    %c19 = arith.constant 19 : index
    %c0_70 = arith.constant 0 : index
    %202 = vector.load %arg3[%c19, %c0_70] : memref<25x384xf32, #tpu.memory_space<vmem>>, vector<1x256xf32>
    %c20 = arith.constant 20 : index
    %c0_71 = arith.constant 0 : index
    %203 = vector.load %arg3[%c20, %c0_71] : memref<25x384xf32, #tpu.memory_space<vmem>>, vector<1x128xf32>
    %c21 = arith.constant 21 : index
    %c0_72 = arith.constant 0 : index
    %204 = vector.load %arg3[%c21, %c0_72] : memref<25x384xf32, #tpu.memory_space<vmem>>, vector<1x128xf32>
    %c22 = arith.constant 22 : index
    %c0_73 = arith.constant 0 : index
    %205 = vector.load %arg3[%c22, %c0_73] : memref<25x384xf32, #tpu.memory_space<vmem>>, vector<1x128xf32>
    %c23 = arith.constant 23 : index
    %c0_74 = arith.constant 0 : index
    %206 = vector.load %arg3[%c23, %c0_74] : memref<25x384xf32, #tpu.memory_space<vmem>>, vector<1x128xf32>
    %c24 = arith.constant 24 : index
    %c0_75 = arith.constant 0 : index
    %207 = vector.load %arg3[%c24, %c0_75] : memref<25x384xf32, #tpu.memory_space<vmem>>, vector<1x128xf32>
    %c1_76 = arith.constant 1 : index
    %c0_77 = arith.constant 0 : index
    %c0_78 = arith.constant 0 : index
    %208 = vector.load %arg1[%c1_76, %c0_77, %c0_78] : memref<2x128x768xbf16, #tpu.memory_space<vmem>>, vector<1x128x384xbf16>
    %209 = vector.shape_cast %208 : vector<1x128x384xbf16> to vector<128x384xbf16>
    %c1_79 = arith.constant 1 : index
    %c0_80 = arith.constant 0 : index
    %c384_81 = arith.constant 384 : index
    %210 = vector.load %arg1[%c1_79, %c0_80, %c384_81] : memref<2x128x768xbf16, #tpu.memory_space<vmem>>, vector<1x128x128xbf16>
    %211 = vector.shape_cast %210 : vector<1x128x128xbf16> to vector<128x128xbf16>
    %c1_82 = arith.constant 1 : index
    %c0_83 = arith.constant 0 : index
    %c512_84 = arith.constant 512 : index
    %212 = vector.load %arg1[%c1_82, %c0_83, %c512_84] : memref<2x128x768xbf16, #tpu.memory_space<vmem>>, vector<1x128x256xbf16>
    %213 = vector.shape_cast %212 : vector<1x128x256xbf16> to vector<128x256xbf16>
    %c1_85 = arith.constant 1 : index
    %c0_86 = arith.constant 0 : index
    %c0_87 = arith.constant 0 : index
    %214 = vector.load %arg2[%c1_85, %c0_86, %c0_87] : memref<2x256x128xbf16, #tpu.memory_space<vmem>>, vector<1x256x128xbf16>
    %215 = vector.shape_cast %214 : vector<1x256x128xbf16> to vector<256x128xbf16>
    %216 = arith.truncf %199 : vector<16x128xf32> to vector<16x128xbf16>
    %cst_88 = arith.constant dense<0.000000e+00> : vector<16x384xf32>
    %217 = tpu.matmul %216, %209, %cst_88 {dimension_numbers = #tpu.dot_dimension_numbers<[1], [0], [0], [1], [0, 0, 1, 1], [], []>} : vector<16x128xbf16>, vector<128x384xbf16>, vector<16x384xf32> -> vector<16x384xf32>
    %218 = vector.broadcast %200 : vector<1x384xf32> to vector<16x384xf32>
    %219 = arith.addf %217, %218 : vector<16x384xf32>
    %220 = arith.truncf %219 : vector<16x384xf32> to vector<16x384xbf16>
    %221 = vector.extract_strided_slice %220 {offsets = [0, 0], sizes = [16, 32], strides = [1, 1]} : vector<16x384xbf16> to vector<16x32xbf16>
    %222 = vector.extract_strided_slice %220 {offsets = [0, 128], sizes = [16, 32], strides = [1, 1]} : vector<16x384xbf16> to vector<16x32xbf16>
    %223 = vector.extract_strided_slice %220 {offsets = [0, 256], sizes = [16, 32], strides = [1, 1]} : vector<16x384xbf16> to vector<16x32xbf16>
    %cst_89 = arith.constant dense<0.000000e+00> : vector<16x16xf32>
    %224 = tpu.matmul %221, %222, %cst_89 {dimension_numbers = #tpu.dot_dimension_numbers<[1], [1], [0], [0], [0, 0, 1, 0], [], []>} : vector<16x32xbf16>, vector<16x32xbf16>, vector<16x16xf32> -> vector<16x16xf32>
    %cst_90 = arith.constant 0.176776692 : f32
    %225 = vector.broadcast %cst_90 : f32 to vector<16x16xf32>
    %226 = arith.mulf %224, %225 : vector<16x16xf32>
    %227 = arith.addf %226, %45 : vector<16x16xf32>
    %cst_91 = arith.constant dense<0xFF800000> : vector<16xf32>
    %228 = vector.multi_reduction <maximumf>, %227, %cst_91 [1] : vector<16x16xf32> to vector<16xf32>
    %229 = vector.shape_cast %228 : vector<16xf32> to vector<16x1xf32>
    %230 = vector.broadcast %229 : vector<16x1xf32> to vector<16x16xf32>
    %231 = arith.subf %227, %230 : vector<16x16xf32>
    %232 = math.exp %231 : vector<16x16xf32>
    %cst_92 = arith.constant dense<0.000000e+00> : vector<16xf32>
    %233 = vector.multi_reduction <add>, %232, %cst_92 [1] : vector<16x16xf32> to vector<16xf32>
    %234 = vector.shape_cast %233 : vector<16xf32> to vector<16x1xf32>
    %235 = vector.broadcast %234 : vector<16x1xf32> to vector<16x16xf32>
    %236 = arith.divf %232, %235 : vector<16x16xf32>
    %237 = arith.truncf %236 : vector<16x16xf32> to vector<16x16xbf16>
    %cst_93 = arith.constant dense<0.000000e+00> : vector<16x32xf32>
    %238 = tpu.matmul %237, %223, %cst_93 {dimension_numbers = #tpu.dot_dimension_numbers<[1], [0], [0], [1], [0, 0, 1, 1], [], []>} : vector<16x16xbf16>, vector<16x32xbf16>, vector<16x32xf32> -> vector<16x32xf32>
    %239 = vector.extract_strided_slice %220 {offsets = [0, 32], sizes = [16, 32], strides = [1, 1]} : vector<16x384xbf16> to vector<16x32xbf16>
    %240 = vector.extract_strided_slice %220 {offsets = [0, 160], sizes = [16, 32], strides = [1, 1]} : vector<16x384xbf16> to vector<16x32xbf16>
    %241 = vector.extract_strided_slice %220 {offsets = [0, 288], sizes = [16, 32], strides = [1, 1]} : vector<16x384xbf16> to vector<16x32xbf16>
    %cst_94 = arith.constant dense<0.000000e+00> : vector<16x16xf32>
    %242 = tpu.matmul %239, %240, %cst_94 {dimension_numbers = #tpu.dot_dimension_numbers<[1], [1], [0], [0], [0, 0, 1, 0], [], []>} : vector<16x32xbf16>, vector<16x32xbf16>, vector<16x16xf32> -> vector<16x16xf32>
    %cst_95 = arith.constant 0.176776692 : f32
    %243 = vector.broadcast %cst_95 : f32 to vector<16x16xf32>
    %244 = arith.mulf %242, %243 : vector<16x16xf32>
    %245 = arith.addf %244, %45 : vector<16x16xf32>
    %cst_96 = arith.constant dense<0xFF800000> : vector<16xf32>
    %246 = vector.multi_reduction <maximumf>, %245, %cst_96 [1] : vector<16x16xf32> to vector<16xf32>
    %247 = vector.shape_cast %246 : vector<16xf32> to vector<16x1xf32>
    %248 = vector.broadcast %247 : vector<16x1xf32> to vector<16x16xf32>
    %249 = arith.subf %245, %248 : vector<16x16xf32>
    %250 = math.exp %249 : vector<16x16xf32>
    %cst_97 = arith.constant dense<0.000000e+00> : vector<16xf32>
    %251 = vector.multi_reduction <add>, %250, %cst_97 [1] : vector<16x16xf32> to vector<16xf32>
    %252 = vector.shape_cast %251 : vector<16xf32> to vector<16x1xf32>
    %253 = vector.broadcast %252 : vector<16x1xf32> to vector<16x16xf32>
    %254 = arith.divf %250, %253 : vector<16x16xf32>
    %255 = arith.truncf %254 : vector<16x16xf32> to vector<16x16xbf16>
    %cst_98 = arith.constant dense<0.000000e+00> : vector<16x32xf32>
    %256 = tpu.matmul %255, %241, %cst_98 {dimension_numbers = #tpu.dot_dimension_numbers<[1], [0], [0], [1], [0, 0, 1, 1], [], []>} : vector<16x16xbf16>, vector<16x32xbf16>, vector<16x32xf32> -> vector<16x32xf32>
    %257 = vector.extract_strided_slice %220 {offsets = [0, 64], sizes = [16, 32], strides = [1, 1]} : vector<16x384xbf16> to vector<16x32xbf16>
    %258 = vector.extract_strided_slice %220 {offsets = [0, 192], sizes = [16, 32], strides = [1, 1]} : vector<16x384xbf16> to vector<16x32xbf16>
    %259 = vector.extract_strided_slice %220 {offsets = [0, 320], sizes = [16, 32], strides = [1, 1]} : vector<16x384xbf16> to vector<16x32xbf16>
    %cst_99 = arith.constant dense<0.000000e+00> : vector<16x16xf32>
    %260 = tpu.matmul %257, %258, %cst_99 {dimension_numbers = #tpu.dot_dimension_numbers<[1], [1], [0], [0], [0, 0, 1, 0], [], []>} : vector<16x32xbf16>, vector<16x32xbf16>, vector<16x16xf32> -> vector<16x16xf32>
    %cst_100 = arith.constant 0.176776692 : f32
    %261 = vector.broadcast %cst_100 : f32 to vector<16x16xf32>
    %262 = arith.mulf %260, %261 : vector<16x16xf32>
    %263 = arith.addf %262, %45 : vector<16x16xf32>
    %cst_101 = arith.constant dense<0xFF800000> : vector<16xf32>
    %264 = vector.multi_reduction <maximumf>, %263, %cst_101 [1] : vector<16x16xf32> to vector<16xf32>
    %265 = vector.shape_cast %264 : vector<16xf32> to vector<16x1xf32>
    %266 = vector.broadcast %265 : vector<16x1xf32> to vector<16x16xf32>
    %267 = arith.subf %263, %266 : vector<16x16xf32>
    %268 = math.exp %267 : vector<16x16xf32>
    %cst_102 = arith.constant dense<0.000000e+00> : vector<16xf32>
    %269 = vector.multi_reduction <add>, %268, %cst_102 [1] : vector<16x16xf32> to vector<16xf32>
    %270 = vector.shape_cast %269 : vector<16xf32> to vector<16x1xf32>
    %271 = vector.broadcast %270 : vector<16x1xf32> to vector<16x16xf32>
    %272 = arith.divf %268, %271 : vector<16x16xf32>
    %273 = arith.truncf %272 : vector<16x16xf32> to vector<16x16xbf16>
    %cst_103 = arith.constant dense<0.000000e+00> : vector<16x32xf32>
    %274 = tpu.matmul %273, %259, %cst_103 {dimension_numbers = #tpu.dot_dimension_numbers<[1], [0], [0], [1], [0, 0, 1, 1], [], []>} : vector<16x16xbf16>, vector<16x32xbf16>, vector<16x32xf32> -> vector<16x32xf32>
    %275 = vector.extract_strided_slice %220 {offsets = [0, 96], sizes = [16, 32], strides = [1, 1]} : vector<16x384xbf16> to vector<16x32xbf16>
    %276 = vector.extract_strided_slice %220 {offsets = [0, 224], sizes = [16, 32], strides = [1, 1]} : vector<16x384xbf16> to vector<16x32xbf16>
    %277 = vector.extract_strided_slice %220 {offsets = [0, 352], sizes = [16, 32], strides = [1, 1]} : vector<16x384xbf16> to vector<16x32xbf16>
    %cst_104 = arith.constant dense<0.000000e+00> : vector<16x16xf32>
    %278 = tpu.matmul %275, %276, %cst_104 {dimension_numbers = #tpu.dot_dimension_numbers<[1], [1], [0], [0], [0, 0, 1, 0], [], []>} : vector<16x32xbf16>, vector<16x32xbf16>, vector<16x16xf32> -> vector<16x16xf32>
    %cst_105 = arith.constant 0.176776692 : f32
    %279 = vector.broadcast %cst_105 : f32 to vector<16x16xf32>
    %280 = arith.mulf %278, %279 : vector<16x16xf32>
    %281 = arith.addf %280, %45 : vector<16x16xf32>
    %cst_106 = arith.constant dense<0xFF800000> : vector<16xf32>
    %282 = vector.multi_reduction <maximumf>, %281, %cst_106 [1] : vector<16x16xf32> to vector<16xf32>
    %283 = vector.shape_cast %282 : vector<16xf32> to vector<16x1xf32>
    %284 = vector.broadcast %283 : vector<16x1xf32> to vector<16x16xf32>
    %285 = arith.subf %281, %284 : vector<16x16xf32>
    %286 = math.exp %285 : vector<16x16xf32>
    %cst_107 = arith.constant dense<0.000000e+00> : vector<16xf32>
    %287 = vector.multi_reduction <add>, %286, %cst_107 [1] : vector<16x16xf32> to vector<16xf32>
    %288 = vector.shape_cast %287 : vector<16xf32> to vector<16x1xf32>
    %289 = vector.broadcast %288 : vector<16x1xf32> to vector<16x16xf32>
    %290 = arith.divf %286, %289 : vector<16x16xf32>
    %291 = arith.truncf %290 : vector<16x16xf32> to vector<16x16xbf16>
    %cst_108 = arith.constant dense<0.000000e+00> : vector<16x32xf32>
    %292 = tpu.matmul %291, %277, %cst_108 {dimension_numbers = #tpu.dot_dimension_numbers<[1], [0], [0], [1], [0, 0, 1, 1], [], []>} : vector<16x16xbf16>, vector<16x32xbf16>, vector<16x32xf32> -> vector<16x32xf32>
    %293 = tpu.concatenate %238, %256, %274, %292 in 1 : vector<16x32xf32>, vector<16x32xf32>, vector<16x32xf32>, vector<16x32xf32> -> vector<16x128xf32>
    %294 = arith.truncf %293 : vector<16x128xf32> to vector<16x128xbf16>
    %cst_109 = arith.constant dense<0.000000e+00> : vector<16x128xf32>
    %295 = tpu.matmul %294, %211, %cst_109 {dimension_numbers = #tpu.dot_dimension_numbers<[1], [0], [0], [1], [0, 0, 1, 1], [], []>} : vector<16x128xbf16>, vector<128x128xbf16>, vector<16x128xf32> -> vector<16x128xf32>
    %296 = vector.broadcast %201 : vector<1x128xf32> to vector<16x128xf32>
    %297 = arith.addf %295, %296 : vector<16x128xf32>
    %298 = arith.addf %199, %297 : vector<16x128xf32>
    %cst_110 = arith.constant dense<0.000000e+00> : vector<16xf32>
    %299 = vector.multi_reduction <add>, %298, %cst_110 [1] : vector<16x128xf32> to vector<16xf32>
    %300 = vector.shape_cast %299 : vector<16xf32> to vector<16x1xf32>
    %cst_111 = arith.constant 1.280000e+02 : f32
    %301 = vector.broadcast %cst_111 : f32 to vector<16x1xf32>
    %302 = arith.divf %300, %301 : vector<16x1xf32>
    %303 = vector.broadcast %302 : vector<16x1xf32> to vector<16x128xf32>
    %304 = arith.subf %298, %303 : vector<16x128xf32>
    %305 = arith.mulf %304, %304 : vector<16x128xf32>
    %cst_112 = arith.constant dense<0.000000e+00> : vector<16xf32>
    %306 = vector.multi_reduction <add>, %305, %cst_112 [1] : vector<16x128xf32> to vector<16xf32>
    %307 = vector.shape_cast %306 : vector<16xf32> to vector<16x1xf32>
    %cst_113 = arith.constant 1.280000e+02 : f32
    %308 = vector.broadcast %cst_113 : f32 to vector<16x1xf32>
    %309 = arith.divf %307, %308 : vector<16x1xf32>
    %310 = vector.broadcast %302 : vector<16x1xf32> to vector<16x128xf32>
    %311 = arith.subf %298, %310 : vector<16x128xf32>
    %cst_114 = arith.constant 9.99999974E-6 : f32
    %312 = vector.broadcast %cst_114 : f32 to vector<16x1xf32>
    %313 = arith.addf %309, %312 : vector<16x1xf32>
    %314 = math.rsqrt %313 : vector<16x1xf32>
    %315 = vector.broadcast %314 : vector<16x1xf32> to vector<16x128xf32>
    %316 = arith.mulf %311, %315 : vector<16x128xf32>
    %317 = vector.broadcast %204 : vector<1x128xf32> to vector<16x128xf32>
    %318 = arith.mulf %316, %317 : vector<16x128xf32>
    %319 = vector.broadcast %205 : vector<1x128xf32> to vector<16x128xf32>
    %320 = arith.addf %318, %319 : vector<16x128xf32>
    %321 = arith.truncf %320 : vector<16x128xf32> to vector<16x128xbf16>
    %cst_115 = arith.constant dense<0.000000e+00> : vector<16x256xf32>
    %322 = tpu.matmul %321, %213, %cst_115 {dimension_numbers = #tpu.dot_dimension_numbers<[1], [0], [0], [1], [0, 0, 1, 1], [], []>} : vector<16x128xbf16>, vector<128x256xbf16>, vector<16x256xf32> -> vector<16x256xf32>
    %323 = vector.broadcast %202 : vector<1x256xf32> to vector<16x256xf32>
    %324 = arith.addf %322, %323 : vector<16x256xf32>
    %cst_116 = arith.constant 0.000000e+00 : f32
    %325 = vector.broadcast %cst_116 : f32 to vector<16x256xf32>
    %326 = arith.maximumf %324, %325 : vector<16x256xf32>
    %327 = arith.truncf %326 : vector<16x256xf32> to vector<16x256xbf16>
    %cst_117 = arith.constant dense<0.000000e+00> : vector<16x128xf32>
    %328 = tpu.matmul %327, %215, %cst_117 {dimension_numbers = #tpu.dot_dimension_numbers<[1], [0], [0], [1], [0, 0, 1, 1], [], []>} : vector<16x256xbf16>, vector<256x128xbf16>, vector<16x128xf32> -> vector<16x128xf32>
    %329 = vector.broadcast %203 : vector<1x128xf32> to vector<16x128xf32>
    %330 = arith.addf %328, %329 : vector<16x128xf32>
    %331 = arith.addf %320, %330 : vector<16x128xf32>
    %cst_118 = arith.constant dense<0.000000e+00> : vector<16xf32>
    %332 = vector.multi_reduction <add>, %331, %cst_118 [1] : vector<16x128xf32> to vector<16xf32>
    %333 = vector.shape_cast %332 : vector<16xf32> to vector<16x1xf32>
    %cst_119 = arith.constant 1.280000e+02 : f32
    %334 = vector.broadcast %cst_119 : f32 to vector<16x1xf32>
    %335 = arith.divf %333, %334 : vector<16x1xf32>
    %336 = vector.broadcast %335 : vector<16x1xf32> to vector<16x128xf32>
    %337 = arith.subf %331, %336 : vector<16x128xf32>
    %338 = arith.mulf %337, %337 : vector<16x128xf32>
    %cst_120 = arith.constant dense<0.000000e+00> : vector<16xf32>
    %339 = vector.multi_reduction <add>, %338, %cst_120 [1] : vector<16x128xf32> to vector<16xf32>
    %340 = vector.shape_cast %339 : vector<16xf32> to vector<16x1xf32>
    %cst_121 = arith.constant 1.280000e+02 : f32
    %341 = vector.broadcast %cst_121 : f32 to vector<16x1xf32>
    %342 = arith.divf %340, %341 : vector<16x1xf32>
    %343 = vector.broadcast %335 : vector<16x1xf32> to vector<16x128xf32>
    %344 = arith.subf %331, %343 : vector<16x128xf32>
    %cst_122 = arith.constant 9.99999974E-6 : f32
    %345 = vector.broadcast %cst_122 : f32 to vector<16x1xf32>
    %346 = arith.addf %342, %345 : vector<16x1xf32>
    %347 = math.rsqrt %346 : vector<16x1xf32>
    %348 = vector.broadcast %347 : vector<16x1xf32> to vector<16x128xf32>
    %349 = arith.mulf %344, %348 : vector<16x128xf32>
    %350 = vector.broadcast %206 : vector<1x128xf32> to vector<16x128xf32>
    %351 = arith.mulf %349, %350 : vector<16x128xf32>
    %352 = vector.broadcast %207 : vector<1x128xf32> to vector<16x128xf32>
    %353 = arith.addf %351, %352 : vector<16x128xf32>
    %c0_123 = arith.constant 0 : index
    %c0_124 = arith.constant 0 : index
    %354 = vector.load %arg4[%c0_123, %c0_124] : memref<16x128xf32, #tpu.memory_space<vmem>>, vector<16x128xf32>
    tpu.vector_store %arg4[%c0_123, %c0_124], %353 {strides = array<i32>} : memref<16x128xf32, #tpu.memory_space<vmem>>, vector<16x128xf32>,
    return
  }
}

</mosaic_0001>

<llo_original>
// kernel: lighting_encoder_forward.1
$region0: #{lighting_encoder_forward.1}
  #allocation0 [shape = 'u32[]', space=smem, size = 0x4, offset = 0x4, fixed_abs, tag = 'smem constant byte address 0x4 - core index']
  #allocation1 [shape = 'u32[72,128]{1,0:T(1,128)}', space=vmem, size = 0x9000, scoped, tag = 'internal scratch']
  %s0 = inlined_call_operand.vmem [shape: f32[16,8], index: 0, kind: input, shape index: {}]
  %s1 = inlined_call_operand.hbm [shape: bf16[2,128,768], index: 1, kind: input, shape index: {}]
  %s2 = inlined_call_operand.hbm [shape: bf16[2,256,128], index: 2, kind: input, shape index: {}]
  %s3 = inlined_call_operand.hbm [shape: f32[25,384], index: 3, kind: input, shape index: {}]
  %s4 = inlined_call_operand.hbm [shape: f32[16,128], index: 4, kind: output, shape index: {}]
  %s5 = sld [smem:[#allocation0]]
  $region38: #{lighting_encoder_forward.1} parent=0
    _
  %s7 = ssub.s32 1, %s5
  %s8 = scalar_select 0, %s7, %s5
  $region1: #{lighting_encoder_forward.1} parent=0
    #allocation2 [shape = 'u8[393216]{0}', space=vmem, size = 0x60000, scoped, tag = 'input window, operand 1, single buffered']
    #allocation3 [shape = 's32[1]{0}', space=sflag, size = 0x4, scoped, tag = 'scoped memory for lighting_encoder_forward.1']
    #allocation4 [shape = 's32[1]{0}', space=sflag, size = 0x4, scoped, tag = 'scoped memory for lighting_encoder_forward.1']
    #allocation5 [shape = 'u8[131072]{0}', space=vmem, size = 0x20000, scoped, tag = 'input window, operand 2, single buffered']
    #allocation6 [shape = 's32[1]{0}', space=sflag, size = 0x4, scoped, tag = 'scoped memory for lighting_encoder_forward.1']
    #allocation7 [shape = 'u8[49152]{0}', space=vmem, size = 0xc000, scoped, tag = 'input window, operand 3, single buffered']
    #allocation8 [shape = 'u8[8192]{0}', space=vmem, size = 0x2000, scoped, tag = 'output window, operand 0, single buffered']
    %9 = vsyncpa [#allocation3], 0
    %10 = vsyncpa [#allocation6], 0
    %11 = vsyncpa [#allocation4], 0
    // Predicated region
    $region2: #{lighting_encoder_forward.1} parent=1 // pred_check
      _
    $region3: #{lighting_encoder_forward.1} parent=1 // pred_check_branch
      %13 = sbr.rel (0) target = $region5
    $region4: #{lighting_encoder_forward.1} parent=1 // pred_region
      _
    $region5: #{lighting_encoder_forward.1} parent=1 // pred_fallthru
      _
    // Predicated region
    $region6: #{lighting_encoder_forward.1} parent=1 // pred_check
      _
    $region7: #{lighting_encoder_forward.1} parent=1 // pred_check_branch
      %15 = sbr.rel (0) target = $region9
    $region8: #{lighting_encoder_forward.1} parent=1 // pred_region
      %17 = vsyncadd [#allocation3], 0
      %s18 = sshll.u32 %s1, 4
      %s19 = int_to_ptr.hbm [resolvable:$true] %s18
      %s20 = sshll.u32 [#allocation2], 4
      %s21 = int_to_ptr.vmem [resolvable:$true] %s20
      %26 = dma.hbm_to_vmem [thread:$0]  %s19, 12288, %s21, [#allocation3], 384, 384, 24
    $region9: #{lighting_encoder_forward.1} parent=1 // pred_fallthru
      _
    // Predicated region
    $region10: #{lighting_encoder_forward.1} parent=1 // pred_check
      _
    $region11: #{lighting_encoder_forward.1} parent=1 // pred_check_branch
      %28 = sbr.rel (0) target = $region13
    $region12: #{lighting_encoder_forward.1} parent=1 // pred_region
      %30 = vsyncadd [#allocation6], 0
      %s31 = sshll.u32 %s2, 4
      %s32 = int_to_ptr.hbm [resolvable:$true] %s31
      %s33 = sshll.u32 [#allocation5], 4
      %s34 = int_to_ptr.vmem [resolvable:$true] %s33
      %39 = dma.hbm_to_vmem [thread:$0]  %s32, 4096, %s34, [#allocation6], 64, 64, 4
    $region13: #{lighting_encoder_forward.1} parent=1 // pred_fallthru
      _
    // Predicated region
    $region14: #{lighting_encoder_forward.1} parent=1 // pred_check
      _
    $region15: #{lighting_encoder_forward.1} parent=1 // pred_check_branch
      %41 = sbr.rel (0) target = $region17
    $region16: #{lighting_encoder_forward.1} parent=1 // pred_region
      %43 = vsyncadd [#allocation6], 0
      %s44 = sshll.u32 %s3, 4
      %s45 = int_to_ptr.hbm [resolvable:$true] %s44
      %s46 = sshll.u32 [#allocation7], 4
      %s47 = int_to_ptr.vmem [resolvable:$true] %s46
      %52 = dma.hbm_to_vmem [thread:$0]  %s45, 1536, %s47, [#allocation6], 384, 384, 24
    $region17: #{lighting_encoder_forward.1} parent=1 // pred_fallthru
      _
    // Predicated region
    $region18: #{lighting_encoder_forward.1} parent=1 // pred_check
      _
    $region19: #{lighting_encoder_forward.1} parent=1 // pred_check_branch
      %54 = sbr.rel (0) target = $region21
    $region20: #{lighting_encoder_forward.1} parent=1 // pred_region
      %56 = dma.done [#allocation3], 12288
    $region21: #{lighting_encoder_forward.1} parent=1 // pred_fallthru
      _
    // Predicated region
    $region22: #{lighting_encoder_forward.1} parent=1 // pred_check
      _
    $region23: #{lighting_encoder_forward.1} parent=1 // pred_check_branch
      %58 = sbr.rel (0) target = $region25
    $region24: #{lighting_encoder_forward.1} parent=1 // pred_region
      %60 = dma.done [#allocation6], 4096
    $region25: #{lighting_encoder_forward.1} parent=1 // pred_fallthru
      _
    // Predicated region
    $region26: #{lighting_encoder_forward.1} parent=1 // pred_check
      _
    $region27: #{lighting_encoder_forward.1} parent=1 // pred_check_branch
      %62 = sbr.rel (0) target = $region29
    $region28: #{lighting_encoder_forward.1} parent=1 // pred_region
      %64 = dma.done [#allocation6], 1536
    $region29: #{lighting_encoder_forward.1} parent=1 // pred_fallthru
      _
    %v66 = vld [vmem:[#allocation7] sm:$0xfe]
    %v67 = vld [vmem:[#allocation7 + $0x18] sm:$0x1]
    %v68 = vpack.c.bf16 %v67, %v66
    %v69 = vld [vmem:[#allocation7] ss:$0 sm:$0xff]
    %v70 = vld [vmem:[%s0] sm:$0xff]
    %v71 = vld [vmem:[%s0 + $0x8] sm:$0xff]
    %v72 = vpack.c.bf16 %v71, %v70
    %v74 = vshrl.u32 %v68, 16
    %v76 = vshll.u32 %v68, 16
    %v78 = vrot.slane %v76, 1
    %v79 = vor.u32 %v74, %v78
    %vm80 = vcmask 64512
    %v82 = vsel %vm80, %v72, 0
    %vm84 = vcmask 1043456
    %v86 = vsel %vm84, %v79, 0
    %88 = vmatpush.bf16.msra.mxu0 0
    %89 = vmatpush.bf16.msra.mxu0 0
    %90 = vmatpush.bf16.msra.mxu0 0
    %91 = vmatpush.bf16.msra.mxu0 0
    %92 = vmatpush.bf16.msra.mxu0 0
    %93 = vmatpush.bf16.msra.mxu0 0
    %94 = vmatpush.bf16.msra.mxu0 0
    %95 = vmatpush.bf16.msra.mxu0 %v86
    %96 = vmatmul.bf16.gmra.mxu0 %v82
    %v97 = vpop.f32.mrf.mxu0
    %v98 = vadd.f32 %v69, %v97
    %v99 = vpop.f32.mrf.mxu0
    %v100 = vadd.f32 %v69, %v99
    %101 = vdwg.mxu0
    %v102 = vlaneseq
    %v103 = vshrl.u32 %v102, 7
    %v104 = vadd.s32 %v103, 8
    %vm105 = vcmp.lt.s32.totalorder %v103, 0
    %v106 = vsub.s32 0, %v103
    %v107 = vsel %vm105, %v106, %v103
    %v108 = vshrl.u32 %v107, 3
    %v109 = vand.u32 %v107, 7
    %v110 = vsub.s32 0, %v109
    %v111 = vsel %vm105, %v110, %v109
    %vm112 = vcmp.lt.s32.totalorder %v104, 0
    %v113 = vsub.s32 0, %v104
    %v114 = vsel %vm112, %v113, %v104
    %v115 = vshrl.u32 %v114, 3
    %v116 = vand.u32 %v114, 7
    %v117 = vsub.s32 0, %v116
    %v118 = vsel %vm112, %v117, %v116
    %vm119 = vcmp.ne.s32.totalorder %v111, 0
    %vm120 = vcmp.ne.s32.totalorder %v118, 0
    %vm121 = vcmp.lt.s32.totalorder %v111, 0
    %vm122 = vcmp.lt.s32.totalorder %v118, 0
    %vm123 = vmand %vm121, %vm119
    %vm124 = vmand %vm122, %vm120
    %v125 = vadd.s32 %v111, 8
    %v126 = vadd.s32 %v118, 8
    %v127 = vsel %vm123, %v125, %v111
    %v128 = vsel %vm124, %v126, %v118
    %v129 = vlaneseq
    %v130 = vand.u32 %v129, 127
    %vm131 = vcmp.lt.s32.totalorder %v130, 0
    %v132 = vsub.s32 0, %v130
    %v133 = vsel %vm131, %v132, %v130
    %v134 = vshrl.u32 %v133, 3
    %v135 = vand.u32 %v133, 7
    %v136 = vsub.s32 0, %v135
    %v137 = vsel %vm131, %v136, %v135
    %vm138 = vcmp.ne.s32.totalorder %v137, 0
    %vm139 = vcmp.lt.s32.totalorder %v137, 0
    %vm140 = vmand %vm139, %vm138
    %v141 = vadd.s32 %v137, 8
    %v142 = vsel %vm140, %v141, %v137
    %vm143 = vcmp.eq.s32.totalorder %v127, %v142
    %vm144 = vcmp.eq.s32.totalorder %v128, %v142
    %v145 = vsel %vm143, 0.0, -1e+30
    %v146 = vsel %vm144, 0.0, -1e+30
    %s147 = scalar_lea.vmem [#allocation7], 25
    %v148 = vld [vmem:[%s147] ss:$8 sm:$0x7]
    %v149 = vld [vmem:[#allocation7 + $0x1a] ss:$0 sm:$0xff]
    %s150 = scalar_lea.vmem [#allocation7], 27
    %v151 = vld [vmem:[%s150] ss:$8 sm:$0x3]
    %v152 = vld [vmem:[#allocation7 + $0x1c] ss:$0 sm:$0xff]
    %v153 = vld [vmem:[#allocation7 + $0x1d] ss:$0 sm:$0xff]
    %v154 = vld [vmem:[#allocation7 + $0x1e] ss:$0 sm:$0xff]
    %v155 = vld [vmem:[#allocation7 + $0x1f] ss:$0 sm:$0xff]
    %v156 = vld [vmem:[#allocation7 + $0x30] ss:$0 sm:$0xff]
    %v157 = vld [vmem:[#allocation2] sm:$0xff]
    %v158 = vld [vmem:[#allocation2 + $0x8] sm:$0xf]
    %v159 = vld [vmem:[#allocation2 + $0x18] sm:$0xff]
    %v160 = vld [vmem:[#allocation2 + $0x20] sm:$0xf]
    %v161 = vld [vmem:[#allocation2 + $0x30] sm:$0xff]
    %v162 = vld [vmem:[#allocation2 + $0x38] sm:$0xf]
    %v163 = vld [vmem:[#allocation2 + $0x48] sm:$0xff]
    %v164 = vld [vmem:[#allocation2 + $0x50] sm:$0xf]
    %v165 = vld [vmem:[#allocation2 + $0x60] sm:$0xff]
    %v166 = vld [vmem:[#allocation2 + $0x68] sm:$0xf]
    %v167 = vld [vmem:[#allocation2 + $0x78] sm:$0xff]
    %v168 = vld [vmem:[#allocation2 + $0x80] sm:$0xf]
    %v169 = vld [vmem:[#allocation2 + $0x90] sm:$0xff]
    %v170 = vld [vmem:[#allocation2 + $0x98] sm:$0xf]
    %v171 = vld [vmem:[#allocation2 + $0xa8] sm:$0xff]
    %v172 = vld [vmem:[#allocation2 + $0xb0] sm:$0xf]
    %v173 = vld [vmem:[#allocation2 + $0xc0] sm:$0xff]
    %v174 = vld [vmem:[#allocation2 + $0xc8] sm:$0xf]
    %v175 = vld [vmem:[#allocation2 + $0xd8] sm:$0xff]
    %v176 = vld [vmem:[#allocation2 + $0xe0] sm:$0xf]
    %v177 = vld [vmem:[#allocation2 + $0xf0] sm:$0xff]
    %v178 = vld [vmem:[#allocation2 + $0xf8] sm:$0xf]
    %v179 = vld [vmem:[#allocation2 + $0x108] sm:$0xff]
    %v180 = vld [vmem:[#allocation2 + $0x110] sm:$0xf]
    %v181 = vld [vmem:[#allocation2 + $0x120] sm:$0xff]
    %v182 = vld [vmem:[#allocation2 + $0x128] sm:$0xf]
    %v183 = vld [vmem:[#allocation2 + $0x138] sm:$0xff]
    %v184 = vld [vmem:[#allocation2 + $0x140] sm:$0xf]
    %v185 = vld [vmem:[#allocation2 + $0x150] sm:$0xff]
    %v186 = vld [vmem:[#allocation2 + $0x158] sm:$0xf]
    %v187 = vld [vmem:[#allocation2 + $0x168] sm:$0xff]
    %v188 = vld [vmem:[#allocation2 + $0x170] sm:$0xf]
    %v189 = vld [vmem:[#allocation2 + $0xc] sm:$0xf]
    %v190 = vld [vmem:[#allocation2 + $0x24] sm:$0xf]
    %v191 = vld [vmem:[#allocation2 + $0x3c] sm:$0xf]
    %v192 = vld [vmem:[#allocation2 + $0x54] sm:$0xf]
    %v193 = vld [vmem:[#allocation2 + $0x6c] sm:$0xf]
    %v194 = vld [vmem:[#allocation2 + $0x84] sm:$0xf]
    %v195 = vld [vmem:[#allocation2 + $0x9c] sm:$0xf]
    %v196 = vld [vmem:[#allocation2 + $0xb4] sm:$0xf]
    %v197 = vld [vmem:[#allocation2 + $0xcc] sm:$0xf]
    %v198 = vld [vmem:[#allocation2 + $0xe4] sm:$0xf]
    %v199 = vld [vmem:[#allocation2 + $0xfc] sm:$0xf]
    %v200 = vld [vmem:[#allocation2 + $0x114] sm:$0xf]
    %v201 = vld [vmem:[#allocation2 + $0x12c] sm:$0xf]
    %v202 = vld [vmem:[#allocation2 + $0x144] sm:$0xf]
    %v203 = vld [vmem:[#allocation2 + $0x15c] sm:$0xf]
    %v204 = vld [vmem:[#allocation2 + $0x174] sm:$0xf]
    %v205 = vld [vmem:[#allocation2 + $0x10] sm:$0xff]
    %v206 = vld [vmem:[#allocation2 + $0x28] sm:$0xff]
    %v207 = vld [vmem:[#allocation2 + $0x40] sm:$0xff]
    %v208 = vld [vmem:[#allocation2 + $0x58] sm:$0xff]
    %v209 = vld [vmem:[#allocation2 + $0x70] sm:$0xff]
    %v210 = vld [vmem:[#allocation2 + $0x88] sm:$0xff]
    %v211 = vld [vmem:[#allocation2 + $0xa0] sm:$0xff]
    %v212 = vld [vmem:[#allocation2 + $0xb8] sm:$0xff]
    %v213 = vld [vmem:[#allocation2 + $0xd0] sm:$0xff]
    %v214 = vld [vmem:[#allocation2 + $0xe8] sm:$0xff]
    %v215 = vld [vmem:[#allocation2 + $0x100] sm:$0xff]
    %v216 = vld [vmem:[#allocation2 + $0x118] sm:$0xff]
    %v217 = vld [vmem:[#allocation2 + $0x130] sm:$0xff]
    %v218 = vld [vmem:[#allocation2 + $0x148] sm:$0xff]
    %v219 = vld [vmem:[#allocation2 + $0x160] sm:$0xff]
    %v220 = vld [vmem:[#allocation2 + $0x178] sm:$0xff]
    %v221 = vld [vmem:[#allocation5] sm:$0xf]
    %v222 = vld [vmem:[#allocation5 + $0x4] sm:$0xf]
    %v223 = vld [vmem:[#allocation5 + $0x8] sm:$0xf]
    %v224 = vld [vmem:[#allocation5 + $0xc] sm:$0xf]
    %v225 = vld [vmem:[#allocation5 + $0x10] sm:$0xf]
    %v226 = vld [vmem:[#allocation5 + $0x14] sm:$0xf]
    %v227 = vld [vmem:[#allocation5 + $0x18] sm:$0xf]
    %v228 = vld [vmem:[#allocation5 + $0x1c] sm:$0xf]
    %v229 = vld [vmem:[#allocation5 + $0x20] sm:$0xf]
    %v230 = vld [vmem:[#allocation5 + $0x24] sm:$0xf]
    %v231 = vld [vmem:[#allocation5 + $0x28] sm:$0xf]
    %v232 = vld [vmem:[#allocation5 + $0x2c] sm:$0xf]
    %v233 = vld [vmem:[#allocation5 + $0x30] sm:$0xf]
    %v234 = vld [vmem:[#allocation5 + $0x34] sm:$0xf]
    %v235 = vld [vmem:[#allocation5 + $0x38] sm:$0xf]
    %v236 = vld [vmem:[#allocation5 + $0x3c] sm:$0xf]
    %v237 = vld [vmem:[#allocation5 + $0x40] sm:$0xf]
    %v238 = vld [vmem:[#allocation5 + $0x44] sm:$0xf]
    %v239 = vld [vmem:[#allocation5 + $0x48] sm:$0xf]
    %v240 = vld [vmem:[#allocation5 + $0x4c] sm:$0xf]
    %v241 = vld [vmem:[#allocation5 + $0x50] sm:$0xf]
    %v242 = vld [vmem:[#allocation5 + $0x54] sm:$0xf]
    %v243 = vld [vmem:[#allocation5 + $0x58] sm:$0xf]
    %v244 = vld [vmem:[#allocation5 + $0x5c] sm:$0xf]
    %v245 = vld [vmem:[#allocation5 + $0x60] sm:$0xf]
    %v246 = vld [vmem:[#allocation5 + $0x64] sm:$0xf]
    %v247 = vld [vmem:[#allocation5 + $0x68] sm:$0xf]
    %v248 = vld [vmem:[#allocation5 + $0x6c] sm:$0xf]
    %v249 = vld [vmem:[#allocation5 + $0x70] sm:$0xf]
    %v250 = vld [vmem:[#allocation5 + $0x74] sm:$0xf]
    %v251 = vld [vmem:[#allocation5 + $0x78] sm:$0xf]
    %v252 = vld [vmem:[#allocation5 + $0x7c] sm:$0xf]
    %v253 = vpack.c.bf16 %v100, %v98
    %v255 = vperm.slane %v148, 0
    %v256 = vperm.slane %v148, 1
    %v257 = vperm.slane %v148, 2
    %v293 = vunpack.c.l.b16 %v157
    %v294 = vunpack.c.h.b16 %v157
    %v295 = vunpack.c.l.b16 %v158
    %v296 = vunpack.c.l.b16 %v159
    %v297 = vunpack.c.h.b16 %v159
    %v298 = vunpack.c.l.b16 %v160
    %v299 = vunpack.c.l.b16 %v161
    %v300 = vunpack.c.h.b16 %v161
    %v301 = vunpack.c.l.b16 %v162
    %v302 = vunpack.c.l.b16 %v163
    %v303 = vunpack.c.h.b16 %v163
    %v304 = vunpack.c.l.b16 %v164
    %v305 = vunpack.c.l.b16 %v165
    %v306 = vunpack.c.h.b16 %v165
    %v307 = vunpack.c.l.b16 %v166
    %v308 = vunpack.c.l.b16 %v167
    %v309 = vunpack.c.h.b16 %v167
    %v310 = vunpack.c.l.b16 %v168
    %v311 = vunpack.c.l.b16 %v169
    %v312 = vunpack.c.h.b16 %v169
    %v313 = vunpack.c.l.b16 %v170
    %v314 = vunpack.c.l.b16 %v171
    %v315 = vunpack.c.h.b16 %v171
    %v316 = vunpack.c.l.b16 %v172
    %v317 = vunpack.c.l.b16 %v173
    %v318 = vunpack.c.h.b16 %v173
    %v319 = vunpack.c.l.b16 %v174
    %v320 = vunpack.c.l.b16 %v175
    %v321 = vunpack.c.h.b16 %v175
    %v322 = vunpack.c.l.b16 %v176
    %v323 = vunpack.c.l.b16 %v177
    %v324 = vunpack.c.h.b16 %v177
    %v325 = vunpack.c.l.b16 %v178
    %v326 = vunpack.c.l.b16 %v179
    %v327 = vunpack.c.h.b16 %v179
    %v328 = vunpack.c.l.b16 %v180
    %v329 = vunpack.c.l.b16 %v181
    %v330 = vunpack.c.h.b16 %v181
    %v331 = vunpack.c.l.b16 %v182
    %v332 = vunpack.c.l.b16 %v183
    %v333 = vunpack.c.h.b16 %v183
    %v334 = vunpack.c.l.b16 %v184
    %v335 = vunpack.c.l.b16 %v185
    %v336 = vunpack.c.h.b16 %v185
    %v337 = vunpack.c.l.b16 %v186
    %v338 = vunpack.c.l.b16 %v187
    %v339 = vunpack.c.h.b16 %v187
    %v340 = vunpack.c.l.b16 %v188
    %v341 = vpack.c.b16 %v296, %v293
    %v342 = vpack.c.b16 %v297, %v294
    %v343 = vpack.c.b16 %v298, %v295
    %v344 = vpack.c.b16 %v302, %v299
    %v345 = vpack.c.b16 %v303, %v300
    %v346 = vpack.c.b16 %v304, %v301
    %v347 = vpack.c.b16 %v308, %v305
    %v348 = vpack.c.b16 %v309, %v306
    %v349 = vpack.c.b16 %v310, %v307
    %v350 = vpack.c.b16 %v314, %v311
    %v351 = vpack.c.b16 %v315, %v312
    %v352 = vpack.c.b16 %v316, %v313
    %v353 = vpack.c.b16 %v320, %v317
    %v354 = vpack.c.b16 %v321, %v318
    %v355 = vpack.c.b16 %v322, %v319
    %v356 = vpack.c.b16 %v326, %v323
    %v357 = vpack.c.b16 %v327, %v324
    %v358 = vpack.c.b16 %v328, %v325
    %v359 = vpack.c.b16 %v332, %v329
    %v360 = vpack.c.b16 %v333, %v330
    %v361 = vpack.c.b16 %v334, %v331
    %v362 = vpack.c.b16 %v338, %v335
    %v363 = vpack.c.b16 %v339, %v336
    %v364 = vpack.c.b16 %v340, %v337
    %389 = vmatpush.bf16.msra.mxu0 %v362
    %390 = vmatpush.bf16.msra.mxu0 %v359
    %391 = vmatpush.bf16.msra.mxu0 %v356
    %392 = vmatpush.bf16.msra.mxu0 %v353
    %393 = vmatpush.bf16.msra.mxu0 %v350
    %394 = vmatpush.bf16.msra.mxu0 %v347
    %395 = vmatpush.bf16.msra.mxu0 %v344
    %396 = vmatpush.bf16.msra.mxu0 %v341
    %397 = vmatmul.bf16.gmra.mxu0 %v253
    %v398 = vpop.f32.mrf.mxu0
    %v399 = vadd.f32 %v255, %v398
    %v400 = vpop.f32.mrf.mxu0
    %v401 = vadd.f32 %v255, %v400
    %402 = vdwg.mxu0
    %403 = vmatpush.bf16.msra.mxu0 %v363
    %404 = vmatpush.bf16.msra.mxu0 %v360
    %405 = vmatpush.bf16.msra.mxu0 %v357
    %406 = vmatpush.bf16.msra.mxu0 %v354
    %407 = vmatpush.bf16.msra.mxu0 %v351
    %408 = vmatpush.bf16.msra.mxu0 %v348
    %409 = vmatpush.bf16.msra.mxu0 %v345
    %410 = vmatpush.bf16.msra.mxu0 %v342
    %411 = vmatmul.bf16.gmra.mxu0 %v253
    %v412 = vpop.f32.mrf.mxu0
    %v413 = vadd.f32 %v256, %v412
    %v414 = vpop.f32.mrf.mxu0
    %v415 = vadd.f32 %v256, %v414
    %416 = vdwg.mxu0
    %417 = vmatpush.bf16.msra.mxu0 %v364
    %418 = vmatpush.bf16.msra.mxu0 %v361
    %419 = vmatpush.bf16.msra.mxu0 %v358
    %420 = vmatpush.bf16.msra.mxu0 %v355
    %421 = vmatpush.bf16.msra.mxu0 %v352
    %422 = vmatpush.bf16.msra.mxu0 %v349
    %423 = vmatpush.bf16.msra.mxu0 %v346
    %424 = vmatpush.bf16.msra.mxu0 %v343
    %425 = vmatmul.bf16.gmra.mxu0 %v253
    %v426 = vpop.f32.mrf.mxu0
    %v427 = vadd.f32 %v257, %v426
    %v428 = vpop.f32.mrf.mxu0
    %v429 = vadd.f32 %v257, %v428
    %430 = vdwg.mxu0
    %v431 = vpack.c.bf16 %v413, %v399
    %v432 = vpack.c.bf16 %v427, %v427
    %v433 = vpack.c.bf16 %v415, %v401
    %v434 = vpack.c.bf16 %v429, %v429
    %v437 = vunpack.c.l.b16 %v431
    %v438 = vunpack.c.l.b16 %v433
    %v439 = vpack.c.b16 %v438, %v437
    %v440 = vunpack.c.h.b16 %v431
    %v441 = vunpack.c.h.b16 %v433
    %v442 = vpack.c.b16 %v441, %v440
    %vm443 = vcmask 261120
    %v445 = vsel %vm443, %v439, 0
    %v448 = vsel %vm443, %v442, 0
    %450 = vmatpush.bf16.xpose.msra.mxu0 0
    %451 = vmatpush.bf16.xpose.msra.mxu0 0
    %452 = vmatpush.bf16.xpose.msra.mxu0 0
    %453 = vmatpush.bf16.xpose.msra.mxu0 0
    %454 = vmatpush.bf16.xpose.msra.mxu0 0
    %455 = vmatpush.bf16.xpose.msra.mxu0 0
    %456 = vmatpush.bf16.xpose.msra.mxu0 0
    %457 = vmatpush.bf16.xpose.msra.mxu0 %v448
    %458 = vmatmul.bf16.gmra.mxu0 %v445
    %v459 = vpop.f32.mrf.mxu0
    %v460 = vadd.f32 0.0, %v459
    %v461 = vpop.f32.mrf.mxu0
    %v462 = vadd.f32 0.0, %v461
    %463 = vdwg.mxu0
    %v464 = vmul.f32 %v460, 0.17677669
    %v465 = vmul.f32 %v462, 0.17677669
    %v466 = vadd.f32 %v464, %v145
    %v467 = vadd.f32 %v465, %v146
    %vm468 = vcmask 130048
    %v469 = vsel %vm468, %v466, -inf
    %470 = vmax.xlane.f32.xlu0 %v469
    %v471 = vpop.xlane.xlu0 %470
    %v472 = vsel %vm468, %v467, -inf
    %473 = vmax.xlane.f32.xlu0 %v472
    %v474 = vpop.xlane.xlu0 %473
    %v475 = vsub.f32 %v466, %v471
    %v476 = vsub.f32 %v467, %v474
    %v477 = vmul.f32 %v475, 1.442695
    %v478 = vpow.pop %v477
    %v479 = vmul.f32 %v476, 1.442695
    %v480 = vpow.pop %v479
    %v481 = vsel %vm468, %v478, 0.0
    %482 = vadd.xlane.f32.xlu0 %v481
    %v483 = vpop.xlane.xlu0 %482
    %v484 = vsel %vm468, %v480, 0.0
    %485 = vadd.xlane.f32.xlu0 %v484
    %v486 = vpop.xlane.xlu0 %485
    %v487 = vrcp.pop %v483
    %v488 = vmul.f32 %v483, %v487
    %v489 = vsub.f32 1.0, %v488
    %v490 = vmul.f32 %v487, %v489
    %v491 = vadd.f32 %v487, %v490
    %vm492 = vweird.f32 %v483
    %vm493 = vweird.f32 %v487
    %vm494 = vmor %vm492, %vm493
    %v495 = vsel %vm494, %v487, %v491
    %v496 = vand.u32 2147483647, %v483
    %vm497 = vcmp.eq.f32.partialorder %v496, 8.507059e+37
    %v498 = vand.u32 %v483, 2147483648
    %v499 = vor.u32 1.1754944e-38, %v498
    %v500 = vsel %vm497, %v499, %v495
    %v501 = vmul.f32 %v478, %v500
    %v502 = vrcp.pop %v486
    %v503 = vmul.f32 %v486, %v502
    %v504 = vsub.f32 1.0, %v503
    %v505 = vmul.f32 %v502, %v504
    %v506 = vadd.f32 %v502, %v505
    %vm507 = vweird.f32 %v486
    %vm508 = vweird.f32 %v502
    %vm509 = vmor %vm507, %vm508
    %v510 = vsel %vm509, %v502, %v506
    %v511 = vand.u32 2147483647, %v486
    %vm512 = vcmp.eq.f32.partialorder %v511, 8.507059e+37
    %v513 = vand.u32 %v486, 2147483648
    %v514 = vor.u32 1.1754944e-38, %v513
    %v515 = vsel %vm512, %v514, %v510
    %v516 = vmul.f32 %v480, %v515
    %v517 = vpack.c.bf16 %v516, %v501
    %v520 = vunpack.c.l.b16 %v432
    %v521 = vunpack.c.l.b16 %v434
    %v522 = vpack.c.b16 %v521, %v520
    %v525 = vsel %vm468, %v517, 0
    %527 = vmatpush.bf16.msra.mxu0 0
    %528 = vmatpush.bf16.msra.mxu0 0
    %529 = vmatpush.bf16.msra.mxu0 0
    %530 = vmatpush.bf16.msra.mxu0 0
    %531 = vmatpush.bf16.msra.mxu0 0
    %532 = vmatpush.bf16.msra.mxu0 0
    %533 = vmatpush.bf16.msra.mxu0 0
    %534 = vmatpush.bf16.msra.mxu0 %v522
    %535 = vmatmul.bf16.gmra.mxu0 %v525
    %v536 = vpop.f32.mrf.mxu0
    %v537 = vadd.f32 0.0, %v536
    %v538 = vpop.f32.mrf.mxu0
    %v539 = vadd.f32 0.0, %v538
    %540 = vdwg.mxu0
    %541 = vrot.lane.b32.xlu0 %v439, 96
    %v542 = vpop.permute.xlu0 %541
    %543 = vrot.lane.b32.xlu0 %v442, 96
    %v544 = vpop.permute.xlu0 %543
    %v546 = vsel %vm443, %v542, 0
    %v549 = vsel %vm443, %v544, 0
    %551 = vmatpush.bf16.xpose.msra.mxu0 0
    %552 = vmatpush.bf16.xpose.msra.mxu0 0
    %553 = vmatpush.bf16.xpose.msra.mxu0 0
    %554 = vmatpush.bf16.xpose.msra.mxu0 0
    %555 = vmatpush.bf16.xpose.msra.mxu0 0
    %556 = vmatpush.bf16.xpose.msra.mxu0 0
    %557 = vmatpush.bf16.xpose.msra.mxu0 0
    %558 = vmatpush.bf16.xpose.msra.mxu0 %v549
    %559 = vmatmul.bf16.gmra.mxu0 %v546
    %v560 = vpop.f32.mrf.mxu0
    %v561 = vadd.f32 0.0, %v560
    %v562 = vpop.f32.mrf.mxu0
    %v563 = vadd.f32 0.0, %v562
    %564 = vdwg.mxu0
    %v565 = vmul.f32 %v561, 0.17677669
    %v566 = vmul.f32 %v563, 0.17677669
    %v567 = vadd.f32 %v565, %v145
    %v568 = vadd.f32 %v566, %v146
    %v569 = vsel %vm468, %v567, -inf
    %570 = vmax.xlane.f32.xlu0 %v569
    %v571 = vpop.xlane.xlu0 %570
    %v572 = vsel %vm468, %v568, -inf
    %573 = vmax.xlane.f32.xlu0 %v572
    %v574 = vpop.xlane.xlu0 %573
    %v575 = vsub.f32 %v567, %v571
    %v576 = vsub.f32 %v568, %v574
    %v577 = vmul.f32 %v575, 1.442695
    %v578 = vpow.pop %v577
    %v579 = vmul.f32 %v576, 1.442695
    %v580 = vpow.pop %v579
    %v581 = vsel %vm468, %v578, 0.0
    %582 = vadd.xlane.f32.xlu0 %v581
    %v583 = vpop.xlane.xlu0 %582
    %v584 = vsel %vm468, %v580, 0.0
    %585 = vadd.xlane.f32.xlu0 %v584
    %v586 = vpop.xlane.xlu0 %585
    %v587 = vrcp.pop %v583
    %v588 = vmul.f32 %v583, %v587
    %v589 = vsub.f32 1.0, %v588
    %v590 = vmul.f32 %v587, %v589
    %v591 = vadd.f32 %v587, %v590
    %vm592 = vweird.f32 %v583
    %vm593 = vweird.f32 %v587
    %vm594 = vmor %vm592, %vm593
    %v595 = vsel %vm594, %v587, %v591
    %v596 = vand.u32 2147483647, %v583
    %vm597 = vcmp.eq.f32.partialorder %v596, 8.507059e+37
    %v598 = vand.u32 %v583, 2147483648
    %v599 = vor.u32 1.1754944e-38, %v598
    %v600 = vsel %vm597, %v599, %v595
    %v601 = vmul.f32 %v578, %v600
    %v602 = vrcp.pop %v586
    %v603 = vmul.f32 %v586, %v602
    %v604 = vsub.f32 1.0, %v603
    %v605 = vmul.f32 %v602, %v604
    %v606 = vadd.f32 %v602, %v605
    %vm607 = vweird.f32 %v586
    %vm608 = vweird.f32 %v602
    %vm609 = vmor %vm607, %vm608
    %v610 = vsel %vm609, %v602, %v606
    %v611 = vand.u32 2147483647, %v586
    %vm612 = vcmp.eq.f32.partialorder %v611, 8.507059e+37
    %v613 = vand.u32 %v586, 2147483648
    %v614 = vor.u32 1.1754944e-38, %v613
    %v615 = vsel %vm612, %v614, %v610
    %v616 = vmul.f32 %v580, %v615
    %v617 = vpack.c.bf16 %v616, %v601
    %618 = vrot.lane.b32.xlu0 %v522, 96
    %v619 = vpop.permute.xlu0 %618
    %v622 = vsel %vm468, %v617, 0
    %624 = vmatpush.bf16.msra.mxu0 0
    %625 = vmatpush.bf16.msra.mxu0 0
    %626 = vmatpush.bf16.msra.mxu0 0
    %627 = vmatpush.bf16.msra.mxu0 0
    %628 = vmatpush.bf16.msra.mxu0 0
    %629 = vmatpush.bf16.msra.mxu0 0
    %630 = vmatpush.bf16.msra.mxu0 0
    %631 = vmatpush.bf16.msra.mxu0 %v619
    %632 = vmatmul.bf16.gmra.mxu0 %v622
    %v633 = vpop.f32.mrf.mxu0
    %v634 = vadd.f32 0.0, %v633
    %v635 = vpop.f32.mrf.mxu0
    %v636 = vadd.f32 0.0, %v635
    %637 = vdwg.mxu0
    %638 = vrot.lane.b32.xlu0 %v439, 64
    %v639 = vpop.permute.xlu0 %638
    %640 = vrot.lane.b32.xlu0 %v442, 64
    %v641 = vpop.permute.xlu0 %640
    %v643 = vsel %vm443, %v639, 0
    %v646 = vsel %vm443, %v641, 0
    %648 = vmatpush.bf16.xpose.msra.mxu0 0
    %649 = vmatpush.bf16.xpose.msra.mxu0 0
    %650 = vmatpush.bf16.xpose.msra.mxu0 0
    %651 = vmatpush.bf16.xpose.msra.mxu0 0
    %652 = vmatpush.bf16.xpose.msra.mxu0 0
    %653 = vmatpush.bf16.xpose.msra.mxu0 0
    %654 = vmatpush.bf16.xpose.msra.mxu0 0
    %655 = vmatpush.bf16.xpose.msra.mxu0 %v646
    %656 = vmatmul.bf16.gmra.mxu0 %v643
    %v657 = vpop.f32.mrf.mxu0
    %v658 = vadd.f32 0.0, %v657
    %v659 = vpop.f32.mrf.mxu0
    %v660 = vadd.f32 0.0, %v659
    %661 = vdwg.mxu0
    %v662 = vmul.f32 %v658, 0.17677669
    %v663 = vmul.f32 %v660, 0.17677669
    %v664 = vadd.f32 %v662, %v145
    %v665 = vadd.f32 %v663, %v146
    %v666 = vsel %vm468, %v664, -inf
    %667 = vmax.xlane.f32.xlu0 %v666
    %v668 = vpop.xlane.xlu0 %667
    %v669 = vsel %vm468, %v665, -inf
    %670 = vmax.xlane.f32.xlu0 %v669
    %v671 = vpop.xlane.xlu0 %670
    %v672 = vsub.f32 %v664, %v668
    %v673 = vsub.f32 %v665, %v671
    %v674 = vmul.f32 %v672, 1.442695
    %v675 = vpow.pop %v674
    %v676 = vmul.f32 %v673, 1.442695
    %v677 = vpow.pop %v676
    %v678 = vsel %vm468, %v675, 0.0
    %679 = vadd.xlane.f32.xlu0 %v678
    %v680 = vpop.xlane.xlu0 %679
    %v681 = vsel %vm468, %v677, 0.0
    %682 = vadd.xlane.f32.xlu0 %v681
    %v683 = vpop.xlane.xlu0 %682
    %v684 = vrcp.pop %v680
    %v685 = vmul.f32 %v680, %v684
    %v686 = vsub.f32 1.0, %v685
    %v687 = vmul.f32 %v684, %v686
    %v688 = vadd.f32 %v684, %v687
    %vm689 = vweird.f32 %v680
    %vm690 = vweird.f32 %v684
    %vm691 = vmor %vm689, %vm690
    %v692 = vsel %vm691, %v684, %v688
    %v693 = vand.u32 2147483647, %v680
    %vm694 = vcmp.eq.f32.partialorder %v693, 8.507059e+37
    %v695 = vand.u32 %v680, 2147483648
    %v696 = vor.u32 1.1754944e-38, %v695
    %v697 = vsel %vm694, %v696, %v692
    %v698 = vmul.f32 %v675, %v697
    %v699 = vrcp.pop %v683
    %v700 = vmul.f32 %v683, %v699
    %v701 = vsub.f32 1.0, %v700
    %v702 = vmul.f32 %v699, %v701
    %v703 = vadd.f32 %v699, %v702
    %vm704 = vweird.f32 %v683
    %vm705 = vweird.f32 %v699
    %vm706 = vmor %vm704, %vm705
    %v707 = vsel %vm706, %v699, %v703
    %v708 = vand.u32 2147483647, %v683
    %vm709 = vcmp.eq.f32.partialorder %v708, 8.507059e+37
    %v710 = vand.u32 %v683, 2147483648
    %v711 = vor.u32 1.1754944e-38, %v710
    %v712 = vsel %vm709, %v711, %v707
    %v713 = vmul.f32 %v677, %v712
    %v714 = vpack.c.bf16 %v713, %v698
    %715 = vrot.lane.b32.xlu0 %v522, 64
    %v716 = vpop.permute.xlu0 %715
    %v719 = vsel %vm468, %v714, 0
    %721 = vmatpush.bf16.msra.mxu0 0
    %722 = vmatpush.bf16.msra.mxu0 0
    %723 = vmatpush.bf16.msra.mxu0 0
    %724 = vmatpush.bf16.msra.mxu0 0
    %725 = vmatpush.bf16.msra.mxu0 0
    %726 = vmatpush.bf16.msra.mxu0 0
    %727 = vmatpush.bf16.msra.mxu0 0
    %728 = vmatpush.bf16.msra.mxu0 %v716
    %729 = vmatmul.bf16.gmra.mxu0 %v719
    %v730 = vpop.f32.mrf.mxu0
    %v731 = vadd.f32 0.0, %v730
    %v732 = vpop.f32.mrf.mxu0
    %v733 = vadd.f32 0.0, %v732
    %734 = vdwg.mxu0
    %735 = vrot.lane.b32.xlu0 %v439, 32
    %v736 = vpop.permute.xlu0 %735
    %737 = vrot.lane.b32.xlu0 %v442, 32
    %v738 = vpop.permute.xlu0 %737
    %v740 = vsel %vm443, %v736, 0
    %v743 = vsel %vm443, %v738, 0
    %745 = vmatpush.bf16.xpose.msra.mxu0 0
    %746 = vmatpush.bf16.xpose.msra.mxu0 0
    %747 = vmatpush.bf16.xpose.msra.mxu0 0
    %748 = vmatpush.bf16.xpose.msra.mxu0 0
    %749 = vmatpush.bf16.xpose.msra.mxu0 0
    %750 = vmatpush.bf16.xpose.msra.mxu0 0
    %751 = vmatpush.bf16.xpose.msra.mxu0 0
    %752 = vmatpush.bf16.xpose.msra.mxu0 %v743
    %753 = vmatmul.bf16.gmra.mxu0 %v740
    %v754 = vpop.f32.mrf.mxu0
    %v755 = vadd.f32 0.0, %v754
    %v756 = vpop.f32.mrf.mxu0
    %v757 = vadd.f32 0.0, %v756
    %758 = vdwg.mxu0
    %v759 = vmul.f32 %v755, 0.17677669
    %v760 = vmul.f32 %v757, 0.17677669
    %v761 = vadd.f32 %v759, %v145
    %v762 = vadd.f32 %v760, %v146
    %v763 = vsel %vm468, %v761, -inf
    %764 = vmax.xlane.f32.xlu0 %v763
    %v765 = vpop.xlane.xlu0 %764
    %v766 = vsel %vm468, %v762, -inf
    %767 = vmax.xlane.f32.xlu0 %v766
    %v768 = vpop.xlane.xlu0 %767
    %v769 = vsub.f32 %v761, %v765
    %v770 = vsub.f32 %v762, %v768
    %v771 = vmul.f32 %v769, 1.442695
    %v772 = vpow.pop %v771
    %v773 = vmul.f32 %v770, 1.442695
    %v774 = vpow.pop %v773
    %v775 = vsel %vm468, %v772, 0.0
    %776 = vadd.xlane.f32.xlu0 %v775
    %v777 = vpop.xlane.xlu0 %776
    %v778 = vsel %vm468, %v774, 0.0
    %779 = vadd.xlane.f32.xlu0 %v778
    %v780 = vpop.xlane.xlu0 %779
    %v781 = vrcp.pop %v777
    %v782 = vmul.f32 %v777, %v781
    %v783 = vsub.f32 1.0, %v782
    %v784 = vmul.f32 %v781, %v783
    %v785 = vadd.f32 %v781, %v784
    %vm786 = vweird.f32 %v777
    %vm787 = vweird.f32 %v781
    %vm788 = vmor %vm786, %vm787
    %v789 = vsel %vm788, %v781, %v785
    %v790 = vand.u32 2147483647, %v777
    %vm791 = vcmp.eq.f32.partialorder %v790, 8.507059e+37
    %v792 = vand.u32 %v777, 2147483648
    %v793 = vor.u32 1.1754944e-38, %v792
    %v794 = vsel %vm791, %v793, %v789
    %v795 = vmul.f32 %v772, %v794
    %v796 = vrcp.pop %v780
    %v797 = vmul.f32 %v780, %v796
    %v798 = vsub.f32 1.0, %v797
    %v799 = vmul.f32 %v796, %v798
    %v800 = vadd.f32 %v796, %v799
    %vm801 = vweird.f32 %v780
    %vm802 = vweird.f32 %v796
    %vm803 = vmor %vm801, %vm802
    %v804 = vsel %vm803, %v796, %v800
    %v805 = vand.u32 2147483647, %v780
    %vm806 = vcmp.eq.f32.partialorder %v805, 8.507059e+37
    %v807 = vand.u32 %v780, 2147483648
    %v808 = vor.u32 1.1754944e-38, %v807
    %v809 = vsel %vm806, %v808, %v804
    %v810 = vmul.f32 %v774, %v809
    %v811 = vpack.c.bf16 %v810, %v795
    %812 = vrot.lane.b32.xlu0 %v522, 32
    %v813 = vpop.permute.xlu0 %812
    %v816 = vsel %vm468, %v811, 0
    %818 = vmatpush.bf16.msra.mxu0 0
    %819 = vmatpush.bf16.msra.mxu0 0
    %820 = vmatpush.bf16.msra.mxu0 0
    %821 = vmatpush.bf16.msra.mxu0 0
    %822 = vmatpush.bf16.msra.mxu0 0
    %823 = vmatpush.bf16.msra.mxu0 0
    %824 = vmatpush.bf16.msra.mxu0 0
    %825 = vmatpush.bf16.msra.mxu0 %v813
    %826 = vmatmul.bf16.gmra.mxu0 %v816
    %v827 = vpop.f32.mrf.mxu0
    %v828 = vadd.f32 0.0, %v827
    %v829 = vpop.f32.mrf.mxu0
    %v830 = vadd.f32 0.0, %v829
    %831 = vdwg.mxu0
    %834 = vrot.lane.b32.xlu0 %v634, 32
    %v835 = vpop.permute.xlu0 %834
    %836 = vrot.lane.b32.xlu0 %v636, 32
    %v837 = vpop.permute.xlu0 %836
    %842 = vrot.lane.b32.xlu0 %v731, 64
    %v843 = vpop.permute.xlu0 %842
    %844 = vrot.lane.b32.xlu0 %v733, 64
    %v845 = vpop.permute.xlu0 %844
    %850 = vrot.lane.b32.xlu0 %v828, 96
    %v851 = vpop.permute.xlu0 %850
    %852 = vrot.lane.b32.xlu0 %v830, 96
    %v853 = vpop.permute.xlu0 %852
    %v856 = vsel %vm443, %v537, %v835
    %v857 = vsel %vm443, %v539, %v837
    %vm858 = vcmask 523264
    %v859 = vsel %vm858, %v856, %v843
    %v860 = vsel %vm858, %v857, %v845
    %vm861 = vcmask 785408
    %v862 = vsel %vm861, %v859, %v851
    %v863 = vsel %vm861, %v860, %v853
    %v864 = vpack.c.bf16 %v863, %v862
    %v881 = vunpack.c.l.b16 %v189
    %v882 = vunpack.c.l.b16 %v190
    %v883 = vunpack.c.l.b16 %v191
    %v884 = vunpack.c.l.b16 %v192
    %v885 = vunpack.c.l.b16 %v193
    %v886 = vunpack.c.l.b16 %v194
    %v887 = vunpack.c.l.b16 %v195
    %v888 = vunpack.c.l.b16 %v196
    %v889 = vunpack.c.l.b16 %v197
    %v890 = vunpack.c.l.b16 %v198
    %v891 = vunpack.c.l.b16 %v199
    %v892 = vunpack.c.l.b16 %v200
    %v893 = vunpack.c.l.b16 %v201
    %v894 = vunpack.c.l.b16 %v202
    %v895 = vunpack.c.l.b16 %v203
    %v896 = vunpack.c.l.b16 %v204
    %v897 = vpack.c.b16 %v882, %v881
    %v898 = vpack.c.b16 %v884, %v883
    %v899 = vpack.c.b16 %v886, %v885
    %v900 = vpack.c.b16 %v888, %v887
    %v901 = vpack.c.b16 %v890, %v889
    %v902 = vpack.c.b16 %v892, %v891
    %v903 = vpack.c.b16 %v894, %v893
    %v904 = vpack.c.b16 %v896, %v895
    %913 = vmatpush.bf16.msra.mxu0 %v904
    %914 = vmatpush.bf16.msra.mxu0 %v903
    %915 = vmatpush.bf16.msra.mxu0 %v902
    %916 = vmatpush.bf16.msra.mxu0 %v901
    %917 = vmatpush.bf16.msra.mxu0 %v900
    %918 = vmatpush.bf16.msra.mxu0 %v899
    %919 = vmatpush.bf16.msra.mxu0 %v898
    %920 = vmatpush.bf16.msra.mxu0 %v897
    %921 = vmatmul.bf16.gmra.mxu0 %v864
    %v922 = vpop.f32.mrf.mxu0
    %v923 = vadd.f32 %v149, %v922
    %v924 = vpop.f32.mrf.mxu0
    %v925 = vadd.f32 %v149, %v924
    %926 = vdwg.mxu0
    %v927 = vadd.f32 %v98, %v923
    %v928 = vadd.f32 %v100, %v925
    %929 = vadd.xlane.f32.xlu0 %v927
    %v930 = vpop.xlane.xlu0 %929
    %931 = vadd.xlane.f32.xlu0 %v928
    %v932 = vpop.xlane.xlu0 %931
    %v933 = vrcp.pop 128.0
    %v934 = vmul.f32 128.0, %v933
    %v935 = vsub.f32 1.0, %v934
    %v936 = vmul.f32 %v933, %v935
    %v937 = vadd.f32 %v933, %v936
    %vm938 = vweird.f32 %v933
    %v939 = vsel %vm938, %v933, %v937
    %v940 = vmul.f32 %v930, %v939
    %v941 = vmul.f32 %v932, %v939
    %v942 = vsub.f32 %v927, %v940
    %v943 = vsub.f32 %v928, %v941
    %v944 = vmul.f32 %v942, %v942
    %v945 = vmul.f32 %v943, %v943
    %946 = vadd.xlane.f32.xlu0 %v944
    %v947 = vpop.xlane.xlu0 %946
    %948 = vadd.xlane.f32.xlu0 %v945
    %v949 = vpop.xlane.xlu0 %948
    %v950 = vmul.f32 %v947, %v939
    %v951 = vmul.f32 %v949, %v939
    %v952 = vadd.f32 %v950, 1e-05
    %v953 = vadd.f32 %v951, 1e-05
    %v954 = vrsqrt.pop %v952
    %v955 = vmul.f32 %v954, %v952
    %v956 = vmul.f32 %v955, %v954
    %v957 = vmul.f32 0.5, %v956
    %v958 = vsub.f32 1.5, %v957
    %v959 = vmul.f32 %v954, %v958
    %vm960 = vweird.f32 %v952
    %vm961 = vweird.f32 %v954
    %vm962 = vmor %vm960, %vm961
    %v963 = vsel %vm962, %v954, %v959
    %v964 = vrsqrt.pop %v953
    %v965 = vmul.f32 %v964, %v953
    %v966 = vmul.f32 %v965, %v964
    %v967 = vmul.f32 0.5, %v966
    %v968 = vsub.f32 1.5, %v967
    %v969 = vmul.f32 %v964, %v968
    %vm970 = vweird.f32 %v953
    %vm971 = vweird.f32 %v964
    %vm972 = vmor %vm970, %vm971
    %v973 = vsel %vm972, %v964, %v969
    %v974 = vmul.f32 %v942, %v963
    %v975 = vmul.f32 %v943, %v973
    %v976 = vmul.f32 %v974, %v153
    %v977 = vmul.f32 %v975, %v153
    %v978 = vadd.f32 %v976, %v154
    %v979 = vadd.f32 %v977, %v154
    %v980 = vpack.c.bf16 %v979, %v978
    %v982 = vperm.slane %v151, 0
    %v983 = vperm.slane %v151, 1
    %v1002 = vunpack.c.l.b16 %v205
    %v1003 = vunpack.c.h.b16 %v205
    %v1004 = vunpack.c.l.b16 %v206
    %v1005 = vunpack.c.h.b16 %v206
    %v1006 = vunpack.c.l.b16 %v207
    %v1007 = vunpack.c.h.b16 %v207
    %v1008 = vunpack.c.l.b16 %v208
    %v1009 = vunpack.c.h.b16 %v208
    %v1010 = vunpack.c.l.b16 %v209
    %v1011 = vunpack.c.h.b16 %v209
    %v1012 = vunpack.c.l.b16 %v210
    %v1013 = vunpack.c.h.b16 %v210
    %v1014 = vunpack.c.l.b16 %v211
    %v1015 = vunpack.c.h.b16 %v211
    %v1016 = vunpack.c.l.b16 %v212
    %v1017 = vunpack.c.h.b16 %v212
    %v1018 = vunpack.c.l.b16 %v213
    %v1019 = vunpack.c.h.b16 %v213
    %v1020 = vunpack.c.l.b16 %v214
    %v1021 = vunpack.c.h.b16 %v214
    %v1022 = vunpack.c.l.b16 %v215
    %v1023 = vunpack.c.h.b16 %v215
    %v1024 = vunpack.c.l.b16 %v216
    %v1025 = vunpack.c.h.b16 %v216
    %v1026 = vunpack.c.l.b16 %v217
    %v1027 = vunpack.c.h.b16 %v217
    %v1028 = vunpack.c.l.b16 %v218
    %v1029 = vunpack.c.h.b16 %v218
    %v1030 = vunpack.c.l.b16 %v219
    %v1031 = vunpack.c.h.b16 %v219
    %v1032 = vunpack.c.l.b16 %v220
    %v1033 = vunpack.c.h.b16 %v220
    %v1034 = vpack.c.b16 %v1004, %v1002
    %v1035 = vpack.c.b16 %v1005, %v1003
    %v1036 = vpack.c.b16 %v1008, %v1006
    %v1037 = vpack.c.b16 %v1009, %v1007
    %v1038 = vpack.c.b16 %v1012, %v1010
    %v1039 = vpack.c.b16 %v1013, %v1011
    %v1040 = vpack.c.b16 %v1016, %v1014
    %v1041 = vpack.c.b16 %v1017, %v1015
    %v1042 = vpack.c.b16 %v1020, %v1018
    %v1043 = vpack.c.b16 %v1021, %v1019
    %v1044 = vpack.c.b16 %v1024, %v1022
    %v1045 = vpack.c.b16 %v1025, %v1023
    %v1046 = vpack.c.b16 %v1028, %v1026
    %v1047 = vpack.c.b16 %v1029, %v1027
    %v1048 = vpack.c.b16 %v1032, %v1030
    %v1049 = vpack.c.b16 %v1033, %v1031
    %1066 = vmatpush.bf16.msra.mxu0 %v1048
    %1067 = vmatpush.bf16.msra.mxu0 %v1046
    %1068 = vmatpush.bf16.msra.mxu0 %v1044
    %1069 = vmatpush.bf16.msra.mxu0 %v1042
    %1070 = vmatpush.bf16.msra.mxu0 %v1040
    %1071 = vmatpush.bf16.msra.mxu0 %v1038
    %1072 = vmatpush.bf16.msra.mxu0 %v1036
    %1073 = vmatpush.bf16.msra.mxu0 %v1034
    %1074 = vmatmul.bf16.gmra.mxu0 %v980
    %v1075 = vpop.f32.mrf.mxu0
    %v1076 = vadd.f32 %v982, %v1075
    %v1077 = vpop.f32.mrf.mxu0
    %v1078 = vadd.f32 %v982, %v1077
    %1079 = vdwg.mxu0
    %1080 = vmatpush.bf16.msra.mxu0 %v1049
    %1081 = vmatpush.bf16.msra.mxu0 %v1047
    %1082 = vmatpush.bf16.msra.mxu0 %v1045
    %1083 = vmatpush.bf16.msra.mxu0 %v1043
    %1084 = vmatpush.bf16.msra.mxu0 %v1041
    %1085 = vmatpush.bf16.msra.mxu0 %v1039
    %1086 = vmatpush.bf16.msra.mxu0 %v1037
    %1087 = vmatpush.bf16.msra.mxu0 %v1035
    %1088 = vmatmul.bf16.gmra.mxu0 %v980
    %v1089 = vpop.f32.mrf.mxu0
    %v1090 = vadd.f32 %v983, %v1089
    %v1091 = vpop.f32.mrf.mxu0
    %v1092 = vadd.f32 %v983, %v1091
    %1093 = vdwg.mxu0
    %v1094 = vmax.f32 %v1076, 0.0
    %v1095 = vmax.f32 %v1090, 0.0
    %v1096 = vmax.f32 %v1078, 0.0
    %v1097 = vmax.f32 %v1092, 0.0
    %v1098 = vpack.c.bf16 %v1096, %v1094
    %v1099 = vpack.c.bf16 %v1097, %v1095
    %v1132 = vunpack.c.l.b16 %v221
    %v1133 = vunpack.c.l.b16 %v222
    %v1134 = vunpack.c.l.b16 %v223
    %v1135 = vunpack.c.l.b16 %v224
    %v1136 = vunpack.c.l.b16 %v225
    %v1137 = vunpack.c.l.b16 %v226
    %v1138 = vunpack.c.l.b16 %v227
    %v1139 = vunpack.c.l.b16 %v228
    %v1140 = vunpack.c.l.b16 %v229
    %v1141 = vunpack.c.l.b16 %v230
    %v1142 = vunpack.c.l.b16 %v231
    %v1143 = vunpack.c.l.b16 %v232
    %v1144 = vunpack.c.l.b16 %v233
    %v1145 = vunpack.c.l.b16 %v234
    %v1146 = vunpack.c.l.b16 %v235
    %v1147 = vunpack.c.l.b16 %v236
    %v1148 = vunpack.c.l.b16 %v237
    %v1149 = vunpack.c.l.b16 %v238
    %v1150 = vunpack.c.l.b16 %v239
    %v1151 = vunpack.c.l.b16 %v240
    %v1152 = vunpack.c.l.b16 %v241
    %v1153 = vunpack.c.l.b16 %v242
    %v1154 = vunpack.c.l.b16 %v243
    %v1155 = vunpack.c.l.b16 %v244
    %v1156 = vunpack.c.l.b16 %v245
    %v1157 = vunpack.c.l.b16 %v246
    %v1158 = vunpack.c.l.b16 %v247
    %v1159 = vunpack.c.l.b16 %v248
    %v1160 = vunpack.c.l.b16 %v249
    %v1161 = vunpack.c.l.b16 %v250
    %v1162 = vunpack.c.l.b16 %v251
    %v1163 = vunpack.c.l.b16 %v252
    %v1164 = vpack.c.b16 %v1133, %v1132
    %v1165 = vpack.c.b16 %v1135, %v1134
    %v1166 = vpack.c.b16 %v1137, %v1136
    %v1167 = vpack.c.b16 %v1139, %v1138
    %v1168 = vpack.c.b16 %v1141, %v1140
    %v1169 = vpack.c.b16 %v1143, %v1142
    %v1170 = vpack.c.b16 %v1145, %v1144
    %v1171 = vpack.c.b16 %v1147, %v1146
    %v1172 = vpack.c.b16 %v1149, %v1148
    %v1173 = vpack.c.b16 %v1151, %v1150
    %v1174 = vpack.c.b16 %v1153, %v1152
    %v1175 = vpack.c.b16 %v1155, %v1154
    %v1176 = vpack.c.b16 %v1157, %v1156
    %v1177 = vpack.c.b16 %v1159, %v1158
    %v1178 = vpack.c.b16 %v1161, %v1160
    %v1179 = vpack.c.b16 %v1163, %v1162
    %1196 = vmatpush.bf16.msra.mxu0 %v1171
    %1197 = vmatpush.bf16.msra.mxu0 %v1170
    %1198 = vmatpush.bf16.msra.mxu0 %v1169
    %1199 = vmatpush.bf16.msra.mxu0 %v1168
    %1200 = vmatpush.bf16.msra.mxu0 %v1167
    %1201 = vmatpush.bf16.msra.mxu0 %v1166
    %1202 = vmatpush.bf16.msra.mxu0 %v1165
    %1203 = vmatpush.bf16.msra.mxu0 %v1164
    %1204 = vmatmul.bf16.gmra.mxu0 %v1098
    %v1205 = vpop.f32.mrf.mxu0
    %v1206 = vadd.f32 %v152, %v1205
    %v1207 = vpop.f32.mrf.mxu0
    %v1208 = vadd.f32 %v152, %v1207
    %1209 = vdwg.mxu0
    %1210 = vmatpush.bf16.msra.mxu0 %v1179
    %1211 = vmatpush.bf16.msra.mxu0 %v1178
    %1212 = vmatpush.bf16.msra.mxu0 %v1177
    %1213 = vmatpush.bf16.msra.mxu0 %v1176
    %1214 = vmatpush.bf16.msra.mxu0 %v1175
    %1215 = vmatpush.bf16.msra.mxu0 %v1174
    %1216 = vmatpush.bf16.msra.mxu0 %v1173
    %1217 = vmatpush.bf16.msra.mxu0 %v1172
    %1218 = vmatmul.bf16.gmra.mxu0 %v1099
    %v1219 = vpop.f32.mrf.mxu0
    %v1220 = vadd.f32 %v1206, %v1219
    %v1221 = vpop.f32.mrf.mxu0
    %v1222 = vadd.f32 %v1208, %v1221
    %1223 = vdwg.mxu0
    %v1224 = vadd.f32 %v978, %v1220
    %v1225 = vadd.f32 %v979, %v1222
    %1226 = vadd.xlane.f32.xlu0 %v1224
    %v1227 = vpop.xlane.xlu0 %1226
    %1228 = vadd.xlane.f32.xlu0 %v1225
    %v1229 = vpop.xlane.xlu0 %1228
    %v1230 = vmul.f32 %v1227, %v939
    %v1231 = vmul.f32 %v1229, %v939
    %v1232 = vsub.f32 %v1224, %v1230
    %v1233 = vsub.f32 %v1225, %v1231
    %v1234 = vmul.f32 %v1232, %v1232
    %v1235 = vmul.f32 %v1233, %v1233
    %1236 = vadd.xlane.f32.xlu0 %v1234
    %v1237 = vpop.xlane.xlu0 %1236
    %1238 = vadd.xlane.f32.xlu0 %v1235
    %v1239 = vpop.xlane.xlu0 %1238
    %v1240 = vmul.f32 %v1237, %v939
    %v1241 = vmul.f32 %v1239, %v939
    %v1242 = vadd.f32 %v1240, 1e-05
    %v1243 = vadd.f32 %v1241, 1e-05
    %v1244 = vrsqrt.pop %v1242
    %v1245 = vmul.f32 %v1244, %v1242
    %v1246 = vmul.f32 %v1245, %v1244
    %v1247 = vmul.f32 0.5, %v1246
    %v1248 = vsub.f32 1.5, %v1247
    %v1249 = vmul.f32 %v1244, %v1248
    %vm1250 = vweird.f32 %v1242
    %vm1251 = vweird.f32 %v1244
    %vm1252 = vmor %vm1250, %vm1251
    %v1253 = vsel %vm1252, %v1244, %v1249
    %v1254 = vrsqrt.pop %v1243
    %v1255 = vmul.f32 %v1254, %v1243
    %v1256 = vmul.f32 %v1255, %v1254
    %v1257 = vmul.f32 0.5, %v1256
    %v1258 = vsub.f32 1.5, %v1257
    %v1259 = vmul.f32 %v1254, %v1258
    %vm1260 = vweird.f32 %v1243
    %vm1261 = vweird.f32 %v1254
    %vm1262 = vmor %vm1260, %vm1261
    %v1263 = vsel %vm1262, %v1254, %v1259
    %v1264 = vmul.f32 %v1232, %v1253
    %v1265 = vmul.f32 %v1233, %v1263
    %v1266 = vmul.f32 %v1264, %v155
    %v1267 = vmul.f32 %v1265, %v155
    %v1268 = vadd.f32 %v1266, %v156
    %v1269 = vadd.f32 %v1267, %v156
    %s1270 = scalar_lea.vmem [#allocation7], 49
    %v1271 = vld [vmem:[%s1270] ss:$8 sm:$0x7]
    %v1272 = vld [vmem:[#allocation7 + $0x32] ss:$0 sm:$0xff]
    %s1273 = scalar_lea.vmem [#allocation7], 51
    %v1274 = vld [vmem:[%s1273] ss:$8 sm:$0x3]
    %v1275 = vld [vmem:[#allocation7 + $0x34] ss:$0 sm:$0xff]
    %v1276 = vld [vmem:[#allocation7 + $0x35] ss:$0 sm:$0xff]
    %v1277 = vld [vmem:[#allocation7 + $0x36] ss:$0 sm:$0xff]
    %v1278 = vld [vmem:[#allocation7 + $0x37] ss:$0 sm:$0xff]
    %v1279 = vld [vmem:[#allocation7 + $0x48] ss:$0 sm:$0xff]
    %s1280 = scalar_lea.vmem [#allocation2], 384
    %v1281 = vld [vmem:[%s1280] sm:$0xff]
    %v1282 = vld [vmem:[%s1280 + $0x8] sm:$0xf]
    %v1283 = vld [vmem:[%s1280 + $0x18] sm:$0xff]
    %v1284 = vld [vmem:[%s1280 + $0x20] sm:$0xf]
    %v1285 = vld [vmem:[%s1280 + $0x30] sm:$0xff]
    %v1286 = vld [vmem:[%s1280 + $0x38] sm:$0xf]
    %v1287 = vld [vmem:[%s1280 + $0x48] sm:$0xff]
    %v1288 = vld [vmem:[%s1280 + $0x50] sm:$0xf]
    %v1289 = vld [vmem:[%s1280 + $0x60] sm:$0xff]
    %v1290 = vld [vmem:[%s1280 + $0x68] sm:$0xf]
    %v1291 = vld [vmem:[%s1280 + $0x78] sm:$0xff]
    %v1292 = vld [vmem:[%s1280 + $0x80] sm:$0xf]
    %v1293 = vld [vmem:[%s1280 + $0x90] sm:$0xff]
    %v1294 = vld [vmem:[%s1280 + $0x98] sm:$0xf]
    %v1295 = vld [vmem:[%s1280 + $0xa8] sm:$0xff]
    %v1296 = vld [vmem:[%s1280 + $0xb0] sm:$0xf]
    %v1297 = vld [vmem:[%s1280 + $0xc0] sm:$0xff]
    %v1298 = vld [vmem:[%s1280 + $0xc8] sm:$0xf]
    %v1299 = vld [vmem:[%s1280 + $0xd8] sm:$0xff]
    %v1300 = vld [vmem:[%s1280 + $0xe0] sm:$0xf]
    %v1301 = vld [vmem:[%s1280 + $0xf0] sm:$0xff]
    %v1302 = vld [vmem:[%s1280 + $0xf8] sm:$0xf]
    %v1303 = vld [vmem:[%s1280 + $0x108] sm:$0xff]
    %v1304 = vld [vmem:[%s1280 + $0x110] sm:$0xf]
    %v1305 = vld [vmem:[%s1280 + $0x120] sm:$0xff]
    %v1306 = vld [vmem:[%s1280 + $0x128] sm:$0xf]
    %v1307 = vld [vmem:[%s1280 + $0x138] sm:$0xff]
    %v1308 = vld [vmem:[%s1280 + $0x140] sm:$0xf]
    %v1309 = vld [vmem:[%s1280 + $0x150] sm:$0xff]
    %v1310 = vld [vmem:[%s1280 + $0x158] sm:$0xf]
    %v1311 = vld [vmem:[%s1280 + $0x168] sm:$0xff]
    %v1312 = vld [vmem:[%s1280 + $0x170] sm:$0xf]
    %v1313 = vld [vmem:[%s1280 + $0xc] sm:$0xf]
    %v1314 = vld [vmem:[%s1280 + $0x24] sm:$0xf]
    %v1315 = vld [vmem:[%s1280 + $0x3c] sm:$0xf]
    %v1316 = vld [vmem:[%s1280 + $0x54] sm:$0xf]
    %v1317 = vld [vmem:[%s1280 + $0x6c] sm:$0xf]
    %v1318 = vld [vmem:[%s1280 + $0x84] sm:$0xf]
    %v1319 = vld [vmem:[%s1280 + $0x9c] sm:$0xf]
    %v1320 = vld [vmem:[%s1280 + $0xb4] sm:$0xf]
    %v1321 = vld [vmem:[%s1280 + $0xcc] sm:$0xf]
    %v1322 = vld [vmem:[%s1280 + $0xe4] sm:$0xf]
    %v1323 = vld [vmem:[%s1280 + $0xfc] sm:$0xf]
    %v1324 = vld [vmem:[%s1280 + $0x114] sm:$0xf]
    %v1325 = vld [vmem:[%s1280 + $0x12c] sm:$0xf]
    %v1326 = vld [vmem:[%s1280 + $0x144] sm:$0xf]
    %v1327 = vld [vmem:[%s1280 + $0x15c] sm:$0xf]
    %v1328 = vld [vmem:[%s1280 + $0x174] sm:$0xf]
    %v1329 = vld [vmem:[%s1280 + $0x10] sm:$0xff]
    %v1330 = vld [vmem:[%s1280 + $0x28] sm:$0xff]
    %v1331 = vld [vmem:[%s1280 + $0x40] sm:$0xff]
    %v1332 = vld [vmem:[%s1280 + $0x58] sm:$0xff]
    %v1333 = vld [vmem:[%s1280 + $0x70] sm:$0xff]
    %v1334 = vld [vmem:[%s1280 + $0x88] sm:$0xff]
    %v1335 = vld [vmem:[%s1280 + $0xa0] sm:$0xff]
    %v1336 = vld [vmem:[%s1280 + $0xb8] sm:$0xff]
    %v1337 = vld [vmem:[%s1280 + $0xd0] sm:$0xff]
    %v1338 = vld [vmem:[%s1280 + $0xe8] sm:$0xff]
    %v1339 = vld [vmem:[%s1280 + $0x100] sm:$0xff]
    %v1340 = vld [vmem:[%s1280 + $0x118] sm:$0xff]
    %v1341 = vld [vmem:[%s1280 + $0x130] sm:$0xff]
    %v1342 = vld [vmem:[%s1280 + $0x148] sm:$0xff]
    %v1343 = vld [vmem:[%s1280 + $0x160] sm:$0xff]
    %v1344 = vld [vmem:[%s1280 + $0x178] sm:$0xff]
    %s1345 = scalar_lea.vmem [#allocation5], 128
    %v1346 = vld [vmem:[%s1345] sm:$0xf]
    %v1347 = vld [vmem:[%s1345 + $0x4] sm:$0xf]
    %v1348 = vld [vmem:[%s1345 + $0x8] sm:$0xf]
    %v1349 = vld [vmem:[%s1345 + $0xc] sm:$0xf]
    %v1350 = vld [vmem:[%s1345 + $0x10] sm:$0xf]
    %v1351 = vld [vmem:[%s1345 + $0x14] sm:$0xf]
    %v1352 = vld [vmem:[%s1345 + $0x18] sm:$0xf]
    %v1353 = vld [vmem:[%s1345 + $0x1c] sm:$0xf]
    %v1354 = vld [vmem:[%s1345 + $0x20] sm:$0xf]
    %v1355 = vld [vmem:[%s1345 + $0x24] sm:$0xf]
    %v1356 = vld [vmem:[%s1345 + $0x28] sm:$0xf]
    %v1357 = vld [vmem:[%s1345 + $0x2c] sm:$0xf]
    %v1358 = vld [vmem:[%s1345 + $0x30] sm:$0xf]
    %v1359 = vld [vmem:[%s1345 + $0x34] sm:$0xf]
    %v1360 = vld [vmem:[%s1345 + $0x38] sm:$0xf]
    %v1361 = vld [vmem:[%s1345 + $0x3c] sm:$0xf]
    %v1362 = vld [vmem:[%s1345 + $0x40] sm:$0xf]
    %v1363 = vld [vmem:[%s1345 + $0x44] sm:$0xf]
    %v1364 = vld [vmem:[%s1345 + $0x48] sm:$0xf]
    %v1365 = vld [vmem:[%s1345 + $0x4c] sm:$0xf]
    %v1366 = vld [vmem:[%s1345 + $0x50] sm:$0xf]
    %v1367 = vld [vmem:[%s1345 + $0x54] sm:$0xf]
    %v1368 = vld [vmem:[%s1345 + $0x58] sm:$0xf]
    %v1369 = vld [vmem:[%s1345 + $0x5c] sm:$0xf]
    %v1370 = vld [vmem:[%s1345 + $0x60] sm:$0xf]
    %v1371 = vld [vmem:[%s1345 + $0x64] sm:$0xf]
    %v1372 = vld [vmem:[%s1345 + $0x68] sm:$0xf]
    %v1373 = vld [vmem:[%s1345 + $0x6c] sm:$0xf]
    %v1374 = vld [vmem:[%s1345 + $0x70] sm:$0xf]
    %v1375 = vld [vmem:[%s1345 + $0x74] sm:$0xf]
    %v1376 = vld [vmem:[%s1345 + $0x78] sm:$0xf]
    %v1377 = vld [vmem:[%s1345 + $0x7c] sm:$0xf]
    %v1378 = vpack.c.bf16 %v1269, %v1268
    %v1380 = vperm.slane %v1271, 0
    %v1381 = vperm.slane %v1271, 1
    %v1382 = vperm.slane %v1271, 2
    %v1418 = vunpack.c.l.b16 %v1281
    %v1419 = vunpack.c.h.b16 %v1281
    %v1420 = vunpack.c.l.b16 %v1282
    %v1421 = vunpack.c.l.b16 %v1283
    %v1422 = vunpack.c.h.b16 %v1283
    %v1423 = vunpack.c.l.b16 %v1284
    %v1424 = vunpack.c.l.b16 %v1285
    %v1425 = vunpack.c.h.b16 %v1285
    %v1426 = vunpack.c.l.b16 %v1286
    %v1427 = vunpack.c.l.b16 %v1287
    %v1428 = vunpack.c.h.b16 %v1287
    %v1429 = vunpack.c.l.b16 %v1288
    %v1430 = vunpack.c.l.b16 %v1289
    %v1431 = vunpack.c.h.b16 %v1289
    %v1432 = vunpack.c.l.b16 %v1290
    %v1433 = vunpack.c.l.b16 %v1291
    %v1434 = vunpack.c.h.b16 %v1291
    %v1435 = vunpack.c.l.b16 %v1292
    %v1436 = vunpack.c.l.b16 %v1293
    %v1437 = vunpack.c.h.b16 %v1293
    %v1438 = vunpack.c.l.b16 %v1294
    %v1439 = vunpack.c.l.b16 %v1295
    %v1440 = vunpack.c.h.b16 %v1295
    %v1441 = vunpack.c.l.b16 %v1296
    %v1442 = vunpack.c.l.b16 %v1297
    %v1443 = vunpack.c.h.b16 %v1297
    %v1444 = vunpack.c.l.b16 %v1298
    %v1445 = vunpack.c.l.b16 %v1299
    %v1446 = vunpack.c.h.b16 %v1299
    %v1447 = vunpack.c.l.b16 %v1300
    %v1448 = vunpack.c.l.b16 %v1301
    %v1449 = vunpack.c.h.b16 %v1301
    %v1450 = vunpack.c.l.b16 %v1302
    %v1451 = vunpack.c.l.b16 %v1303
    %v1452 = vunpack.c.h.b16 %v1303
    %v1453 = vunpack.c.l.b16 %v1304
    %v1454 = vunpack.c.l.b16 %v1305
    %v1455 = vunpack.c.h.b16 %v1305
    %v1456 = vunpack.c.l.b16 %v1306
    %v1457 = vunpack.c.l.b16 %v1307
    %v1458 = vunpack.c.h.b16 %v1307
    %v1459 = vunpack.c.l.b16 %v1308
    %v1460 = vunpack.c.l.b16 %v1309
    %v1461 = vunpack.c.h.b16 %v1309
    %v1462 = vunpack.c.l.b16 %v1310
    %v1463 = vunpack.c.l.b16 %v1311
    %v1464 = vunpack.c.h.b16 %v1311
    %v1465 = vunpack.c.l.b16 %v1312
    %v1466 = vpack.c.b16 %v1421, %v1418
    %v1467 = vpack.c.b16 %v1422, %v1419
    %v1468 = vpack.c.b16 %v1423, %v1420
    %v1469 = vpack.c.b16 %v1427, %v1424
    %v1470 = vpack.c.b16 %v1428, %v1425
    %v1471 = vpack.c.b16 %v1429, %v1426
    %v1472 = vpack.c.b16 %v1433, %v1430
    %v1473 = vpack.c.b16 %v1434, %v1431
    %v1474 = vpack.c.b16 %v1435, %v1432
    %v1475 = vpack.c.b16 %v1439, %v1436
    %v1476 = vpack.c.b16 %v1440, %v1437
    %v1477 = vpack.c.b16 %v1441, %v1438
    %v1478 = vpack.c.b16 %v1445, %v1442
    %v1479 = vpack.c.b16 %v1446, %v1443
    %v1480 = vpack.c.b16 %v1447, %v1444
    %v1481 = vpack.c.b16 %v1451, %v1448
    %v1482 = vpack.c.b16 %v1452, %v1449
    %v1483 = vpack.c.b16 %v1453, %v1450
    %v1484 = vpack.c.b16 %v1457, %v1454
    %v1485 = vpack.c.b16 %v1458, %v1455
    %v1486 = vpack.c.b16 %v1459, %v1456
    %v1487 = vpack.c.b16 %v1463, %v1460
    %v1488 = vpack.c.b16 %v1464, %v1461
    %v1489 = vpack.c.b16 %v1465, %v1462
    %1514 = vmatpush.bf16.msra.mxu0 %v1487
    %1515 = vmatpush.bf16.msra.mxu0 %v1484
    %1516 = vmatpush.bf16.msra.mxu0 %v1481
    %1517 = vmatpush.bf16.msra.mxu0 %v1478
    %1518 = vmatpush.bf16.msra.mxu0 %v1475
    %1519 = vmatpush.bf16.msra.mxu0 %v1472
    %1520 = vmatpush.bf16.msra.mxu0 %v1469
    %1521 = vmatpush.bf16.msra.mxu0 %v1466
    %1522 = vmatmul.bf16.gmra.mxu0 %v1378
    %v1523 = vpop.f32.mrf.mxu0
    %v1524 = vadd.f32 %v1380, %v1523
    %v1525 = vpop.f32.mrf.mxu0
    %v1526 = vadd.f32 %v1380, %v1525
    %1527 = vdwg.mxu0
    %1528 = vmatpush.bf16.msra.mxu0 %v1488
    %1529 = vmatpush.bf16.msra.mxu0 %v1485
    %1530 = vmatpush.bf16.msra.mxu0 %v1482
    %1531 = vmatpush.bf16.msra.mxu0 %v1479
    %1532 = vmatpush.bf16.msra.mxu0 %v1476
    %1533 = vmatpush.bf16.msra.mxu0 %v1473
    %1534 = vmatpush.bf16.msra.mxu0 %v1470
    %1535 = vmatpush.bf16.msra.mxu0 %v1467
    %1536 = vmatmul.bf16.gmra.mxu0 %v1378
    %v1537 = vpop.f32.mrf.mxu0
    %v1538 = vadd.f32 %v1381, %v1537
    %v1539 = vpop.f32.mrf.mxu0
    %v1540 = vadd.f32 %v1381, %v1539
    %1541 = vdwg.mxu0
    %1542 = vmatpush.bf16.msra.mxu0 %v1489
    %1543 = vmatpush.bf16.msra.mxu0 %v1486
    %1544 = vmatpush.bf16.msra.mxu0 %v1483
    %1545 = vmatpush.bf16.msra.mxu0 %v1480
    %1546 = vmatpush.bf16.msra.mxu0 %v1477
    %1547 = vmatpush.bf16.msra.mxu0 %v1474
    %1548 = vmatpush.bf16.msra.mxu0 %v1471
    %1549 = vmatpush.bf16.msra.mxu0 %v1468
    %1550 = vmatmul.bf16.gmra.mxu0 %v1378
    %v1551 = vpop.f32.mrf.mxu0
    %v1552 = vadd.f32 %v1382, %v1551
    %v1553 = vpop.f32.mrf.mxu0
    %v1554 = vadd.f32 %v1382, %v1553
    %1555 = vdwg.mxu0
    %v1556 = vpack.c.bf16 %v1538, %v1524
    %v1557 = vpack.c.bf16 %v1552, %v1552
    %v1558 = vpack.c.bf16 %v1540, %v1526
    %v1559 = vpack.c.bf16 %v1554, %v1554
    %v1562 = vunpack.c.l.b16 %v1556
    %v1563 = vunpack.c.l.b16 %v1558
    %v1564 = vpack.c.b16 %v1563, %v1562
    %v1565 = vunpack.c.h.b16 %v1556
    %v1566 = vunpack.c.h.b16 %v1558
    %v1567 = vpack.c.b16 %v1566, %v1565
    %v1569 = vsel %vm443, %v1564, 0
    %v1572 = vsel %vm443, %v1567, 0
    %1574 = vmatpush.bf16.xpose.msra.mxu0 0
    %1575 = vmatpush.bf16.xpose.msra.mxu0 0
    %1576 = vmatpush.bf16.xpose.msra.mxu0 0
    %1577 = vmatpush.bf16.xpose.msra.mxu0 0
    %1578 = vmatpush.bf16.xpose.msra.mxu0 0
    %1579 = vmatpush.bf16.xpose.msra.mxu0 0
    %1580 = vmatpush.bf16.xpose.msra.mxu0 0
    %1581 = vmatpush.bf16.xpose.msra.mxu0 %v1572
    %1582 = vmatmul.bf16.gmra.mxu0 %v1569
    %v1583 = vpop.f32.mrf.mxu0
    %v1584 = vadd.f32 0.0, %v1583
    %v1585 = vpop.f32.mrf.mxu0
    %v1586 = vadd.f32 0.0, %v1585
    %1587 = vdwg.mxu0
    %v1588 = vmul.f32 %v1584, 0.17677669
    %v1589 = vmul.f32 %v1586, 0.17677669
    %v1590 = vadd.f32 %v1588, %v145
    %v1591 = vadd.f32 %v1589, %v146
    %v1592 = vsel %vm468, %v1590, -inf
    %1593 = vmax.xlane.f32.xlu0 %v1592
    %v1594 = vpop.xlane.xlu0 %1593
    %v1595 = vsel %vm468, %v1591, -inf
    %1596 = vmax.xlane.f32.xlu0 %v1595
    %v1597 = vpop.xlane.xlu0 %1596
    %v1598 = vsub.f32 %v1590, %v1594
    %v1599 = vsub.f32 %v1591, %v1597
    %v1600 = vmul.f32 %v1598, 1.442695
    %v1601 = vpow.pop %v1600
    %v1602 = vmul.f32 %v1599, 1.442695
    %v1603 = vpow.pop %v1602
    %v1604 = vsel %vm468, %v1601, 0.0
    %1605 = vadd.xlane.f32.xlu0 %v1604
    %v1606 = vpop.xlane.xlu0 %1605
    %v1607 = vsel %vm468, %v1603, 0.0
    %1608 = vadd.xlane.f32.xlu0 %v1607
    %v1609 = vpop.xlane.xlu0 %1608
    %v1610 = vrcp.pop %v1606
    %v1611 = vmul.f32 %v1606, %v1610
    %v1612 = vsub.f32 1.0, %v1611
    %v1613 = vmul.f32 %v1610, %v1612
    %v1614 = vadd.f32 %v1610, %v1613
    %vm1615 = vweird.f32 %v1606
    %vm1616 = vweird.f32 %v1610
    %vm1617 = vmor %vm1615, %vm1616
    %v1618 = vsel %vm1617, %v1610, %v1614
    %v1619 = vand.u32 2147483647, %v1606
    %vm1620 = vcmp.eq.f32.partialorder %v1619, 8.507059e+37
    %v1621 = vand.u32 %v1606, 2147483648
    %v1622 = vor.u32 1.1754944e-38, %v1621
    %v1623 = vsel %vm1620, %v1622, %v1618
    %v1624 = vmul.f32 %v1601, %v1623
    %v1625 = vrcp.pop %v1609
    %v1626 = vmul.f32 %v1609, %v1625
    %v1627 = vsub.f32 1.0, %v1626
    %v1628 = vmul.f32 %v1625, %v1627
    %v1629 = vadd.f32 %v1625, %v1628
    %vm1630 = vweird.f32 %v1609
    %vm1631 = vweird.f32 %v1625
    %vm1632 = vmor %vm1630, %vm1631
    %v1633 = vsel %vm1632, %v1625, %v1629
    %v1634 = vand.u32 2147483647, %v1609
    %vm1635 = vcmp.eq.f32.partialorder %v1634, 8.507059e+37
    %v1636 = vand.u32 %v1609, 2147483648
    %v1637 = vor.u32 1.1754944e-38, %v1636
    %v1638 = vsel %vm1635, %v1637, %v1633
    %v1639 = vmul.f32 %v1603, %v1638
    %v1640 = vpack.c.bf16 %v1639, %v1624
    %v1643 = vunpack.c.l.b16 %v1557
    %v1644 = vunpack.c.l.b16 %v1559
    %v1645 = vpack.c.b16 %v1644, %v1643
    %v1648 = vsel %vm468, %v1640, 0
    %1650 = vmatpush.bf16.msra.mxu0 0
    %1651 = vmatpush.bf16.msra.mxu0 0
    %1652 = vmatpush.bf16.msra.mxu0 0
    %1653 = vmatpush.bf16.msra.mxu0 0
    %1654 = vmatpush.bf16.msra.mxu0 0
    %1655 = vmatpush.bf16.msra.mxu0 0
    %1656 = vmatpush.bf16.msra.mxu0 0
    %1657 = vmatpush.bf16.msra.mxu0 %v1645
    %1658 = vmatmul.bf16.gmra.mxu0 %v1648
    %v1659 = vpop.f32.mrf.mxu0
    %v1660 = vadd.f32 0.0, %v1659
    %v1661 = vpop.f32.mrf.mxu0
    %v1662 = vadd.f32 0.0, %v1661
    %1663 = vdwg.mxu0
    %1664 = vrot.lane.b32.xlu0 %v1564, 96
    %v1665 = vpop.permute.xlu0 %1664
    %1666 = vrot.lane.b32.xlu0 %v1567, 96
    %v1667 = vpop.permute.xlu0 %1666
    %v1669 = vsel %vm443, %v1665, 0
    %v1672 = vsel %vm443, %v1667, 0
    %1674 = vmatpush.bf16.xpose.msra.mxu0 0
    %1675 = vmatpush.bf16.xpose.msra.mxu0 0
    %1676 = vmatpush.bf16.xpose.msra.mxu0 0
    %1677 = vmatpush.bf16.xpose.msra.mxu0 0
    %1678 = vmatpush.bf16.xpose.msra.mxu0 0
    %1679 = vmatpush.bf16.xpose.msra.mxu0 0
    %1680 = vmatpush.bf16.xpose.msra.mxu0 0
    %1681 = vmatpush.bf16.xpose.msra.mxu0 %v1672
    %1682 = vmatmul.bf16.gmra.mxu0 %v1669
    %v1683 = vpop.f32.mrf.mxu0
    %v1684 = vadd.f32 0.0, %v1683
    %v1685 = vpop.f32.mrf.mxu0
    %v1686 = vadd.f32 0.0, %v1685
    %1687 = vdwg.mxu0
    %v1688 = vmul.f32 %v1684, 0.17677669
    %v1689 = vmul.f32 %v1686, 0.17677669
    %v1690 = vadd.f32 %v1688, %v145
    %v1691 = vadd.f32 %v1689, %v146
    %v1692 = vsel %vm468, %v1690, -inf
    %1693 = vmax.xlane.f32.xlu0 %v1692
    %v1694 = vpop.xlane.xlu0 %1693
    %v1695 = vsel %vm468, %v1691, -inf
    %1696 = vmax.xlane.f32.xlu0 %v1695
    %v1697 = vpop.xlane.xlu0 %1696
    %v1698 = vsub.f32 %v1690, %v1694
    %v1699 = vsub.f32 %v1691, %v1697
    %v1700 = vmul.f32 %v1698, 1.442695
    %v1701 = vpow.pop %v1700
    %v1702 = vmul.f32 %v1699, 1.442695
    %v1703 = vpow.pop %v1702
    %v1704 = vsel %vm468, %v1701, 0.0
    %1705 = vadd.xlane.f32.xlu0 %v1704
    %v1706 = vpop.xlane.xlu0 %1705
    %v1707 = vsel %vm468, %v1703, 0.0
    %1708 = vadd.xlane.f32.xlu0 %v1707
    %v1709 = vpop.xlane.xlu0 %1708
    %v1710 = vrcp.pop %v1706
    %v1711 = vmul.f32 %v1706, %v1710
    %v1712 = vsub.f32 1.0, %v1711
    %v1713 = vmul.f32 %v1710, %v1712
    %v1714 = vadd.f32 %v1710, %v1713
    %vm1715 = vweird.f32 %v1706
    %vm1716 = vweird.f32 %v1710
    %vm1717 = vmor %vm1715, %vm1716
    %v1718 = vsel %vm1717, %v1710, %v1714
    %v1719 = vand.u32 2147483647, %v1706
    %vm1720 = vcmp.eq.f32.partialorder %v1719, 8.507059e+37
    %v1721 = vand.u32 %v1706, 2147483648
    %v1722 = vor.u32 1.1754944e-38, %v1721
    %v1723 = vsel %vm1720, %v1722, %v1718
    %v1724 = vmul.f32 %v1701, %v1723
    %v1725 = vrcp.pop %v1709
    %v1726 = vmul.f32 %v1709, %v1725
    %v1727 = vsub.f32 1.0, %v1726
    %v1728 = vmul.f32 %v1725, %v1727
    %v1729 = vadd.f32 %v1725, %v1728
    %vm1730 = vweird.f32 %v1709
    %vm1731 = vweird.f32 %v1725
    %vm1732 = vmor %vm1730, %vm1731
    %v1733 = vsel %vm1732, %v1725, %v1729
    %v1734 = vand.u32 2147483647, %v1709
    %vm1735 = vcmp.eq.f32.partialorder %v1734, 8.507059e+37
    %v1736 = vand.u32 %v1709, 2147483648
    %v1737 = vor.u32 1.1754944e-38, %v1736
    %v1738 = vsel %vm1735, %v1737, %v1733
    %v1739 = vmul.f32 %v1703, %v1738
    %v1740 = vpack.c.bf16 %v1739, %v1724
    %1741 = vrot.lane.b32.xlu0 %v1645, 96
    %v1742 = vpop.permute.xlu0 %1741
    %v1745 = vsel %vm468, %v1740, 0
    %1747 = vmatpush.bf16.msra.mxu0 0
    %1748 = vmatpush.bf16.msra.mxu0 0
    %1749 = vmatpush.bf16.msra.mxu0 0
    %1750 = vmatpush.bf16.msra.mxu0 0
    %1751 = vmatpush.bf16.msra.mxu0 0
    %1752 = vmatpush.bf16.msra.mxu0 0
    %1753 = vmatpush.bf16.msra.mxu0 0
    %1754 = vmatpush.bf16.msra.mxu0 %v1742
    %1755 = vmatmul.bf16.gmra.mxu0 %v1745
    %v1756 = vpop.f32.mrf.mxu0
    %v1757 = vadd.f32 0.0, %v1756
    %v1758 = vpop.f32.mrf.mxu0
    %v1759 = vadd.f32 0.0, %v1758
    %1760 = vdwg.mxu0
    %1761 = vrot.lane.b32.xlu0 %v1564, 64
    %v1762 = vpop.permute.xlu0 %1761
    %1763 = vrot.lane.b32.xlu0 %v1567, 64
    %v1764 = vpop.permute.xlu0 %1763
    %v1766 = vsel %vm443, %v1762, 0
    %v1769 = vsel %vm443, %v1764, 0
    %1771 = vmatpush.bf16.xpose.msra.mxu0 0
    %1772 = vmatpush.bf16.xpose.msra.mxu0 0
    %1773 = vmatpush.bf16.xpose.msra.mxu0 0
    %1774 = vmatpush.bf16.xpose.msra.mxu0 0
    %1775 = vmatpush.bf16.xpose.msra.mxu0 0
    %1776 = vmatpush.bf16.xpose.msra.mxu0 0
    %1777 = vmatpush.bf16.xpose.msra.mxu0 0
    %1778 = vmatpush.bf16.xpose.msra.mxu0 %v1769
    %1779 = vmatmul.bf16.gmra.mxu0 %v1766
    %v1780 = vpop.f32.mrf.mxu0
    %v1781 = vadd.f32 0.0, %v1780
    %v1782 = vpop.f32.mrf.mxu0
    %v1783 = vadd.f32 0.0, %v1782
    %1784 = vdwg.mxu0
    %v1785 = vmul.f32 %v1781, 0.17677669
    %v1786 = vmul.f32 %v1783, 0.17677669
    %v1787 = vadd.f32 %v1785, %v145
    %v1788 = vadd.f32 %v1786, %v146
    %v1789 = vsel %vm468, %v1787, -inf
    %1790 = vmax.xlane.f32.xlu0 %v1789
    %v1791 = vpop.xlane.xlu0 %1790
    %v1792 = vsel %vm468, %v1788, -inf
    %1793 = vmax.xlane.f32.xlu0 %v1792
    %v1794 = vpop.xlane.xlu0 %1793
    %v1795 = vsub.f32 %v1787, %v1791
    %v1796 = vsub.f32 %v1788, %v1794
    %v1797 = vmul.f32 %v1795, 1.442695
    %v1798 = vpow.pop %v1797
    %v1799 = vmul.f32 %v1796, 1.442695
    %v1800 = vpow.pop %v1799
    %v1801 = vsel %vm468, %v1798, 0.0
    %1802 = vadd.xlane.f32.xlu0 %v1801
    %v1803 = vpop.xlane.xlu0 %1802
    %v1804 = vsel %vm468, %v1800, 0.0
    %1805 = vadd.xlane.f32.xlu0 %v1804
    %v1806 = vpop.xlane.xlu0 %1805
    %v1807 = vrcp.pop %v1803
    %v1808 = vmul.f32 %v1803, %v1807
    %v1809 = vsub.f32 1.0, %v1808
    %v1810 = vmul.f32 %v1807, %v1809
    %v1811 = vadd.f32 %v1807, %v1810
    %vm1812 = vweird.f32 %v1803
    %vm1813 = vweird.f32 %v1807
    %vm1814 = vmor %vm1812, %vm1813
    %v1815 = vsel %vm1814, %v1807, %v1811
    %v1816 = vand.u32 2147483647, %v1803
    %vm1817 = vcmp.eq.f32.partialorder %v1816, 8.507059e+37
    %v1818 = vand.u32 %v1803, 2147483648
    %v1819 = vor.u32 1.1754944e-38, %v1818
    %v1820 = vsel %vm1817, %v1819, %v1815
    %v1821 = vmul.f32 %v1798, %v1820
    %v1822 = vrcp.pop %v1806
    %v1823 = vmul.f32 %v1806, %v1822
    %v1824 = vsub.f32 1.0, %v1823
    %v1825 = vmul.f32 %v1822, %v1824
    %v1826 = vadd.f32 %v1822, %v1825
    %vm1827 = vweird.f32 %v1806
    %vm1828 = vweird.f32 %v1822
    %vm1829 = vmor %vm1827, %vm1828
    %v1830 = vsel %vm1829, %v1822, %v1826
    %v1831 = vand.u32 2147483647, %v1806
    %vm1832 = vcmp.eq.f32.partialorder %v1831, 8.507059e+37
    %v1833 = vand.u32 %v1806, 2147483648
    %v1834 = vor.u32 1.1754944e-38, %v1833
    %v1835 = vsel %vm1832, %v1834, %v1830
    %v1836 = vmul.f32 %v1800, %v1835
    %v1837 = vpack.c.bf16 %v1836, %v1821
    %1838 = vrot.lane.b32.xlu0 %v1645, 64
    %v1839 = vpop.permute.xlu0 %1838
    %v1842 = vsel %vm468, %v1837, 0
    %1844 = vmatpush.bf16.msra.mxu0 0
    %1845 = vmatpush.bf16.msra.mxu0 0
    %1846 = vmatpush.bf16.msra.mxu0 0
    %1847 = vmatpush.bf16.msra.mxu0 0
    %1848 = vmatpush.bf16.msra.mxu0 0
    %1849 = vmatpush.bf16.msra.mxu0 0
    %1850 = vmatpush.bf16.msra.mxu0 0
    %1851 = vmatpush.bf16.msra.mxu0 %v1839
    %1852 = vmatmul.bf16.gmra.mxu0 %v1842
    %v1853 = vpop.f32.mrf.mxu0
    %v1854 = vadd.f32 0.0, %v1853
    %v1855 = vpop.f32.mrf.mxu0
    %v1856 = vadd.f32 0.0, %v1855
    %1857 = vdwg.mxu0
    %1858 = vrot.lane.b32.xlu0 %v1564, 32
    %v1859 = vpop.permute.xlu0 %1858
    %1860 = vrot.lane.b32.xlu0 %v1567, 32
    %v1861 = vpop.permute.xlu0 %1860
    %v1863 = vsel %vm443, %v1859, 0
    %v1866 = vsel %vm443, %v1861, 0
    %1868 = vmatpush.bf16.xpose.msra.mxu0 0
    %1869 = vmatpush.bf16.xpose.msra.mxu0 0
    %1870 = vmatpush.bf16.xpose.msra.mxu0 0
    %1871 = vmatpush.bf16.xpose.msra.mxu0 0
    %1872 = vmatpush.bf16.xpose.msra.mxu0 0
    %1873 = vmatpush.bf16.xpose.msra.mxu0 0
    %1874 = vmatpush.bf16.xpose.msra.mxu0 0
    %1875 = vmatpush.bf16.xpose.msra.mxu0 %v1866
    %1876 = vmatmul.bf16.gmra.mxu0 %v1863
    %v1877 = vpop.f32.mrf.mxu0
    %v1878 = vadd.f32 0.0, %v1877
    %v1879 = vpop.f32.mrf.mxu0
    %v1880 = vadd.f32 0.0, %v1879
    %1881 = vdwg.mxu0
    %v1882 = vmul.f32 %v1878, 0.17677669
    %v1883 = vmul.f32 %v1880, 0.17677669
    %v1884 = vadd.f32 %v1882, %v145
    %v1885 = vadd.f32 %v1883, %v146
    %v1886 = vsel %vm468, %v1884, -inf
    %1887 = vmax.xlane.f32.xlu0 %v1886
    %v1888 = vpop.xlane.xlu0 %1887
    %v1889 = vsel %vm468, %v1885, -inf
    %1890 = vmax.xlane.f32.xlu0 %v1889
    %v1891 = vpop.xlane.xlu0 %1890
    %v1892 = vsub.f32 %v1884, %v1888
    %v1893 = vsub.f32 %v1885, %v1891
    %v1894 = vmul.f32 %v1892, 1.442695
    %v1895 = vpow.pop %v1894
    %v1896 = vmul.f32 %v1893, 1.442695
    %v1897 = vpow.pop %v1896
    %v1898 = vsel %vm468, %v1895, 0.0
    %1899 = vadd.xlane.f32.xlu0 %v1898
    %v1900 = vpop.xlane.xlu0 %1899
    %v1901 = vsel %vm468, %v1897, 0.0
    %1902 = vadd.xlane.f32.xlu0 %v1901
    %v1903 = vpop.xlane.xlu0 %1902
    %v1904 = vrcp.pop %v1900
    %v1905 = vmul.f32 %v1900, %v1904
    %v1906 = vsub.f32 1.0, %v1905
    %v1907 = vmul.f32 %v1904, %v1906
    %v1908 = vadd.f32 %v1904, %v1907
    %vm1909 = vweird.f32 %v1900
    %vm1910 = vweird.f32 %v1904
    %vm1911 = vmor %vm1909, %vm1910
    %v1912 = vsel %vm1911, %v1904, %v1908
    %v1913 = vand.u32 2147483647, %v1900
    %vm1914 = vcmp.eq.f32.partialorder %v1913, 8.507059e+37
    %v1915 = vand.u32 %v1900, 2147483648
    %v1916 = vor.u32 1.1754944e-38, %v1915
    %v1917 = vsel %vm1914, %v1916, %v1912
    %v1918 = vmul.f32 %v1895, %v1917
    %v1919 = vrcp.pop %v1903
    %v1920 = vmul.f32 %v1903, %v1919
    %v1921 = vsub.f32 1.0, %v1920
    %v1922 = vmul.f32 %v1919, %v1921
    %v1923 = vadd.f32 %v1919, %v1922
    %vm1924 = vweird.f32 %v1903
    %vm1925 = vweird.f32 %v1919
    %vm1926 = vmor %vm1924, %vm1925
    %v1927 = vsel %vm1926, %v1919, %v1923
    %v1928 = vand.u32 2147483647, %v1903
    %vm1929 = vcmp.eq.f32.partialorder %v1928, 8.507059e+37
    %v1930 = vand.u32 %v1903, 2147483648
    %v1931 = vor.u32 1.1754944e-38, %v1930
    %v1932 = vsel %vm1929, %v1931, %v1927
    %v1933 = vmul.f32 %v1897, %v1932
    %v1934 = vpack.c.bf16 %v1933, %v1918
    %1935 = vrot.lane.b32.xlu0 %v1645, 32
    %v1936 = vpop.permute.xlu0 %1935
    %v1939 = vsel %vm468, %v1934, 0
    %1941 = vmatpush.bf16.msra.mxu0 0
    %1942 = vmatpush.bf16.msra.mxu0 0
    %1943 = vmatpush.bf16.msra.mxu0 0
    %1944 = vmatpush.bf16.msra.mxu0 0
    %1945 = vmatpush.bf16.msra.mxu0 0
    %1946 = vmatpush.bf16.msra.mxu0 0
    %1947 = vmatpush.bf16.msra.mxu0 0
    %1948 = vmatpush.bf16.msra.mxu0 %v1936
    %1949 = vmatmul.bf16.gmra.mxu0 %v1939
    %v1950 = vpop.f32.mrf.mxu0
    %v1951 = vadd.f32 0.0, %v1950
    %v1952 = vpop.f32.mrf.mxu0
    %v1953 = vadd.f32 0.0, %v1952
    %1954 = vdwg.mxu0
    %1957 = vrot.lane.b32.xlu0 %v1757, 32
    %v1958 = vpop.permute.xlu0 %1957
    %1959 = vrot.lane.b32.xlu0 %v1759, 32
    %v1960 = vpop.permute.xlu0 %1959
    %1965 = vrot.lane.b32.xlu0 %v1854, 64
    %v1966 = vpop.permute.xlu0 %1965
    %1967 = vrot.lane.b32.xlu0 %v1856, 64
    %v1968 = vpop.permute.xlu0 %1967
    %1973 = vrot.lane.b32.xlu0 %v1951, 96
    %v1974 = vpop.permute.xlu0 %1973
    %1975 = vrot.lane.b32.xlu0 %v1953, 96
    %v1976 = vpop.permute.xlu0 %1975
    %v1979 = vsel %vm443, %v1660, %v1958
    %v1980 = vsel %vm443, %v1662, %v1960
    %v1981 = vsel %vm858, %v1979, %v1966
    %v1982 = vsel %vm858, %v1980, %v1968
    %v1983 = vsel %vm861, %v1981, %v1974
    %v1984 = vsel %vm861, %v1982, %v1976
    %v1985 = vpack.c.bf16 %v1984, %v1983
    %v2002 = vunpack.c.l.b16 %v1313
    %v2003 = vunpack.c.l.b16 %v1314
    %v2004 = vunpack.c.l.b16 %v1315
    %v2005 = vunpack.c.l.b16 %v1316
    %v2006 = vunpack.c.l.b16 %v1317
    %v2007 = vunpack.c.l.b16 %v1318
    %v2008 = vunpack.c.l.b16 %v1319
    %v2009 = vunpack.c.l.b16 %v1320
    %v2010 = vunpack.c.l.b16 %v1321
    %v2011 = vunpack.c.l.b16 %v1322
    %v2012 = vunpack.c.l.b16 %v1323
    %v2013 = vunpack.c.l.b16 %v1324
    %v2014 = vunpack.c.l.b16 %v1325
    %v2015 = vunpack.c.l.b16 %v1326
    %v2016 = vunpack.c.l.b16 %v1327
    %v2017 = vunpack.c.l.b16 %v1328
    %v2018 = vpack.c.b16 %v2003, %v2002
    %v2019 = vpack.c.b16 %v2005, %v2004
    %v2020 = vpack.c.b16 %v2007, %v2006
    %v2021 = vpack.c.b16 %v2009, %v2008
    %v2022 = vpack.c.b16 %v2011, %v2010
    %v2023 = vpack.c.b16 %v2013, %v2012
    %v2024 = vpack.c.b16 %v2015, %v2014
    %v2025 = vpack.c.b16 %v2017, %v2016
    %2034 = vmatpush.bf16.msra.mxu0 %v2025
    %2035 = vmatpush.bf16.msra.mxu0 %v2024
    %2036 = vmatpush.bf16.msra.mxu0 %v2023
    %2037 = vmatpush.bf16.msra.mxu0 %v2022
    %2038 = vmatpush.bf16.msra.mxu0 %v2021
    %2039 = vmatpush.bf16.msra.mxu0 %v2020
    %2040 = vmatpush.bf16.msra.mxu0 %v2019
    %2041 = vmatpush.bf16.msra.mxu0 %v2018
    %2042 = vmatmul.bf16.gmra.mxu0 %v1985
    %v2043 = vpop.f32.mrf.mxu0
    %v2044 = vadd.f32 %v1272, %v2043
    %v2045 = vpop.f32.mrf.mxu0
    %v2046 = vadd.f32 %v1272, %v2045
    %2047 = vdwg.mxu0
    %v2048 = vadd.f32 %v1268, %v2044
    %v2049 = vadd.f32 %v1269, %v2046
    %2050 = vadd.xlane.f32.xlu0 %v2048
    %v2051 = vpop.xlane.xlu0 %2050
    %2052 = vadd.xlane.f32.xlu0 %v2049
    %v2053 = vpop.xlane.xlu0 %2052
    %v2054 = vmul.f32 %v2051, %v939
    %v2055 = vmul.f32 %v2053, %v939
    %v2056 = vsub.f32 %v2048, %v2054
    %v2057 = vsub.f32 %v2049, %v2055
    %v2058 = vmul.f32 %v2056, %v2056
    %v2059 = vmul.f32 %v2057, %v2057
    %2060 = vadd.xlane.f32.xlu0 %v2058
    %v2061 = vpop.xlane.xlu0 %2060
    %2062 = vadd.xlane.f32.xlu0 %v2059
    %v2063 = vpop.xlane.xlu0 %2062
    %v2064 = vmul.f32 %v2061, %v939
    %v2065 = vmul.f32 %v2063, %v939
    %v2066 = vadd.f32 %v2064, 1e-05
    %v2067 = vadd.f32 %v2065, 1e-05
    %v2068 = vrsqrt.pop %v2066
    %v2069 = vmul.f32 %v2068, %v2066
    %v2070 = vmul.f32 %v2069, %v2068
    %v2071 = vmul.f32 0.5, %v2070
    %v2072 = vsub.f32 1.5, %v2071
    %v2073 = vmul.f32 %v2068, %v2072
    %vm2074 = vweird.f32 %v2066
    %vm2075 = vweird.f32 %v2068
    %vm2076 = vmor %vm2074, %vm2075
    %v2077 = vsel %vm2076, %v2068, %v2073
    %v2078 = vrsqrt.pop %v2067
    %v2079 = vmul.f32 %v2078, %v2067
    %v2080 = vmul.f32 %v2079, %v2078
    %v2081 = vmul.f32 0.5, %v2080
    %v2082 = vsub.f32 1.5, %v2081
    %v2083 = vmul.f32 %v2078, %v2082
    %vm2084 = vweird.f32 %v2067
    %vm2085 = vweird.f32 %v2078
    %vm2086 = vmor %vm2084, %vm2085
    %v2087 = vsel %vm2086, %v2078, %v2083
    %v2088 = vmul.f32 %v2056, %v2077
    %v2089 = vmul.f32 %v2057, %v2087
    %v2090 = vmul.f32 %v2088, %v1276
    %v2091 = vmul.f32 %v2089, %v1276
    %v2092 = vadd.f32 %v2090, %v1277
    %v2093 = vadd.f32 %v2091, %v1277
    %v2094 = vpack.c.bf16 %v2093, %v2092
    %v2096 = vperm.slane %v1274, 0
    %v2097 = vperm.slane %v1274, 1
    %v2116 = vunpack.c.l.b16 %v1329
    %v2117 = vunpack.c.h.b16 %v1329
    %v2118 = vunpack.c.l.b16 %v1330
    %v2119 = vunpack.c.h.b16 %v1330
    %v2120 = vunpack.c.l.b16 %v1331
    %v2121 = vunpack.c.h.b16 %v1331
    %v2122 = vunpack.c.l.b16 %v1332
    %v2123 = vunpack.c.h.b16 %v1332
    %v2124 = vunpack.c.l.b16 %v1333
    %v2125 = vunpack.c.h.b16 %v1333
    %v2126 = vunpack.c.l.b16 %v1334
    %v2127 = vunpack.c.h.b16 %v1334
    %v2128 = vunpack.c.l.b16 %v1335
    %v2129 = vunpack.c.h.b16 %v1335
    %v2130 = vunpack.c.l.b16 %v1336
    %v2131 = vunpack.c.h.b16 %v1336
    %v2132 = vunpack.c.l.b16 %v1337
    %v2133 = vunpack.c.h.b16 %v1337
    %v2134 = vunpack.c.l.b16 %v1338
    %v2135 = vunpack.c.h.b16 %v1338
    %v2136 = vunpack.c.l.b16 %v1339
    %v2137 = vunpack.c.h.b16 %v1339
    %v2138 = vunpack.c.l.b16 %v1340
    %v2139 = vunpack.c.h.b16 %v1340
    %v2140 = vunpack.c.l.b16 %v1341
    %v2141 = vunpack.c.h.b16 %v1341
    %v2142 = vunpack.c.l.b16 %v1342
    %v2143 = vunpack.c.h.b16 %v1342
    %v2144 = vunpack.c.l.b16 %v1343
    %v2145 = vunpack.c.h.b16 %v1343
    %v2146 = vunpack.c.l.b16 %v1344
    %v2147 = vunpack.c.h.b16 %v1344
    %v2148 = vpack.c.b16 %v2118, %v2116
    %v2149 = vpack.c.b16 %v2119, %v2117
    %v2150 = vpack.c.b16 %v2122, %v2120
    %v2151 = vpack.c.b16 %v2123, %v2121
    %v2152 = vpack.c.b16 %v2126, %v2124
    %v2153 = vpack.c.b16 %v2127, %v2125
    %v2154 = vpack.c.b16 %v2130, %v2128
    %v2155 = vpack.c.b16 %v2131, %v2129
    %v2156 = vpack.c.b16 %v2134, %v2132
    %v2157 = vpack.c.b16 %v2135, %v2133
    %v2158 = vpack.c.b16 %v2138, %v2136
    %v2159 = vpack.c.b16 %v2139, %v2137
    %v2160 = vpack.c.b16 %v2142, %v2140
    %v2161 = vpack.c.b16 %v2143, %v2141
    %v2162 = vpack.c.b16 %v2146, %v2144
    %v2163 = vpack.c.b16 %v2147, %v2145
    %2180 = vmatpush.bf16.msra.mxu0 %v2162
    %2181 = vmatpush.bf16.msra.mxu0 %v2160
    %2182 = vmatpush.bf16.msra.mxu0 %v2158
    %2183 = vmatpush.bf16.msra.mxu0 %v2156
    %2184 = vmatpush.bf16.msra.mxu0 %v2154
    %2185 = vmatpush.bf16.msra.mxu0 %v2152
    %2186 = vmatpush.bf16.msra.mxu0 %v2150
    %2187 = vmatpush.bf16.msra.mxu0 %v2148
    %2188 = vmatmul.bf16.gmra.mxu0 %v2094
    %v2189 = vpop.f32.mrf.mxu0
    %v2190 = vadd.f32 %v2096, %v2189
    %v2191 = vpop.f32.mrf.mxu0
    %v2192 = vadd.f32 %v2096, %v2191
    %2193 = vdwg.mxu0
    %2194 = vmatpush.bf16.msra.mxu0 %v2163
    %2195 = vmatpush.bf16.msra.mxu0 %v2161
    %2196 = vmatpush.bf16.msra.mxu0 %v2159
    %2197 = vmatpush.bf16.msra.mxu0 %v2157
    %2198 = vmatpush.bf16.msra.mxu0 %v2155
    %2199 = vmatpush.bf16.msra.mxu0 %v2153
    %2200 = vmatpush.bf16.msra.mxu0 %v2151
    %2201 = vmatpush.bf16.msra.mxu0 %v2149
    %2202 = vmatmul.bf16.gmra.mxu0 %v2094
    %v2203 = vpop.f32.mrf.mxu0
    %v2204 = vadd.f32 %v2097, %v2203
    %v2205 = vpop.f32.mrf.mxu0
    %v2206 = vadd.f32 %v2097, %v2205
    %2207 = vdwg.mxu0
    %v2208 = vmax.f32 %v2190, 0.0
    %v2209 = vmax.f32 %v2204, 0.0
    %v2210 = vmax.f32 %v2192, 0.0
    %v2211 = vmax.f32 %v2206, 0.0
    %v2212 = vpack.c.bf16 %v2210, %v2208
    %v2213 = vpack.c.bf16 %v2211, %v2209
    %v2246 = vunpack.c.l.b16 %v1346
    %v2247 = vunpack.c.l.b16 %v1347
    %v2248 = vunpack.c.l.b16 %v1348
    %v2249 = vunpack.c.l.b16 %v1349
    %v2250 = vunpack.c.l.b16 %v1350
    %v2251 = vunpack.c.l.b16 %v1351
    %v2252 = vunpack.c.l.b16 %v1352
    %v2253 = vunpack.c.l.b16 %v1353
    %v2254 = vunpack.c.l.b16 %v1354
    %v2255 = vunpack.c.l.b16 %v1355
    %v2256 = vunpack.c.l.b16 %v1356
    %v2257 = vunpack.c.l.b16 %v1357
    %v2258 = vunpack.c.l.b16 %v1358
    %v2259 = vunpack.c.l.b16 %v1359
    %v2260 = vunpack.c.l.b16 %v1360
    %v2261 = vunpack.c.l.b16 %v1361
    %v2262 = vunpack.c.l.b16 %v1362
    %v2263 = vunpack.c.l.b16 %v1363
    %v2264 = vunpack.c.l.b16 %v1364
    %v2265 = vunpack.c.l.b16 %v1365
    %v2266 = vunpack.c.l.b16 %v1366
    %v2267 = vunpack.c.l.b16 %v1367
    %v2268 = vunpack.c.l.b16 %v1368
    %v2269 = vunpack.c.l.b16 %v1369
    %v2270 = vunpack.c.l.b16 %v1370
    %v2271 = vunpack.c.l.b16 %v1371
    %v2272 = vunpack.c.l.b16 %v1372
    %v2273 = vunpack.c.l.b16 %v1373
    %v2274 = vunpack.c.l.b16 %v1374
    %v2275 = vunpack.c.l.b16 %v1375
    %v2276 = vunpack.c.l.b16 %v1376
    %v2277 = vunpack.c.l.b16 %v1377
    %v2278 = vpack.c.b16 %v2247, %v2246
    %v2279 = vpack.c.b16 %v2249, %v2248
    %v2280 = vpack.c.b16 %v2251, %v2250
    %v2281 = vpack.c.b16 %v2253, %v2252
    %v2282 = vpack.c.b16 %v2255, %v2254
    %v2283 = vpack.c.b16 %v2257, %v2256
    %v2284 = vpack.c.b16 %v2259, %v2258
    %v2285 = vpack.c.b16 %v2261, %v2260
    %v2286 = vpack.c.b16 %v2263, %v2262
    %v2287 = vpack.c.b16 %v2265, %v2264
    %v2288 = vpack.c.b16 %v2267, %v2266
    %v2289 = vpack.c.b16 %v2269, %v2268
    %v2290 = vpack.c.b16 %v2271, %v2270
    %v2291 = vpack.c.b16 %v2273, %v2272
    %v2292 = vpack.c.b16 %v2275, %v2274
    %v2293 = vpack.c.b16 %v2277, %v2276
    %2310 = vmatpush.bf16.msra.mxu0 %v2285
    %2311 = vmatpush.bf16.msra.mxu0 %v2284
    %2312 = vmatpush.bf16.msra.mxu0 %v2283
    %2313 = vmatpush.bf16.msra.mxu0 %v2282
    %2314 = vmatpush.bf16.msra.mxu0 %v2281
    %2315 = vmatpush.bf16.msra.mxu0 %v2280
    %2316 = vmatpush.bf16.msra.mxu0 %v2279
    %2317 = vmatpush.bf16.msra.mxu0 %v2278
    %2318 = vmatmul.bf16.gmra.mxu0 %v2212
    %v2319 = vpop.f32.mrf.mxu0
    %v2320 = vadd.f32 %v1275, %v2319
    %v2321 = vpop.f32.mrf.mxu0
    %v2322 = vadd.f32 %v1275, %v2321
    %2323 = vdwg.mxu0
    %2324 = vmatpush.bf16.msra.mxu0 %v2293
    %2325 = vmatpush.bf16.msra.mxu0 %v2292
    %2326 = vmatpush.bf16.msra.mxu0 %v2291
    %2327 = vmatpush.bf16.msra.mxu0 %v2290
    %2328 = vmatpush.bf16.msra.mxu0 %v2289
    %2329 = vmatpush.bf16.msra.mxu0 %v2288
    %2330 = vmatpush.bf16.msra.mxu0 %v2287
    %2331 = vmatpush.bf16.msra.mxu0 %v2286
    %2332 = vmatmul.bf16.gmra.mxu0 %v2213
    %v2333 = vpop.f32.mrf.mxu0
    %v2334 = vadd.f32 %v2320, %v2333
    %v2335 = vpop.f32.mrf.mxu0
    %v2336 = vadd.f32 %v2322, %v2335
    %2337 = vdwg.mxu0
    %v2338 = vadd.f32 %v2092, %v2334
    %v2339 = vadd.f32 %v2093, %v2336
    %2340 = vadd.xlane.f32.xlu0 %v2338
    %v2341 = vpop.xlane.xlu0 %2340
    %2342 = vadd.xlane.f32.xlu0 %v2339
    %v2343 = vpop.xlane.xlu0 %2342
    %v2344 = vmul.f32 %v2341, %v939
    %v2345 = vmul.f32 %v2343, %v939
    %v2346 = vsub.f32 %v2338, %v2344
    %v2347 = vsub.f32 %v2339, %v2345
    %v2348 = vmul.f32 %v2346, %v2346
    %v2349 = vmul.f32 %v2347, %v2347
    %2350 = vadd.xlane.f32.xlu0 %v2348
    %v2351 = vpop.xlane.xlu0 %2350
    %2352 = vadd.xlane.f32.xlu0 %v2349
    %v2353 = vpop.xlane.xlu0 %2352
    %v2354 = vmul.f32 %v2351, %v939
    %v2355 = vmul.f32 %v2353, %v939
    %v2356 = vadd.f32 %v2354, 1e-05
    %v2357 = vadd.f32 %v2355, 1e-05
    %v2358 = vrsqrt.pop %v2356
    %v2359 = vmul.f32 %v2358, %v2356
    %v2360 = vmul.f32 %v2359, %v2358
    %v2361 = vmul.f32 0.5, %v2360
    %v2362 = vsub.f32 1.5, %v2361
    %v2363 = vmul.f32 %v2358, %v2362
    %vm2364 = vweird.f32 %v2356
    %vm2365 = vweird.f32 %v2358
    %vm2366 = vmor %vm2364, %vm2365
    %v2367 = vsel %vm2366, %v2358, %v2363
    %v2368 = vrsqrt.pop %v2357
    %v2369 = vmul.f32 %v2368, %v2357
    %v2370 = vmul.f32 %v2369, %v2368
    %v2371 = vmul.f32 0.5, %v2370
    %v2372 = vsub.f32 1.5, %v2371
    %v2373 = vmul.f32 %v2368, %v2372
    %vm2374 = vweird.f32 %v2357
    %vm2375 = vweird.f32 %v2368
    %vm2376 = vmor %vm2374, %vm2375
    %v2377 = vsel %vm2376, %v2368, %v2373
    %v2378 = vmul.f32 %v2346, %v2367
    %v2379 = vmul.f32 %v2347, %v2377
    %v2380 = vmul.f32 %v2378, %v1278
    %v2381 = vmul.f32 %v2379, %v1278
    %v2382 = vadd.f32 %v2380, %v1279
    %v2383 = vadd.f32 %v2381, %v1279
    %2384 = vst [vmem:[#allocation8] sm:$0xff] %v2382
    %2385 = vst [vmem:[#allocation8 + $0x8] sm:$0xff] %v2383
    // Predicated region
    $region30: #{lighting_encoder_forward.1} parent=1 // pred_check
      _
    $region31: #{lighting_encoder_forward.1} parent=1 // pred_check_branch
      %2387 = sbr.rel (0) target = $region33
    $region32: #{lighting_encoder_forward.1} parent=1 // pred_region
      %2389 = vsyncadd [#allocation4], 0
      %s2390 = sshll.u32 [#allocation8], 4
      %s2391 = int_to_ptr.vmem [resolvable:$true] %s2390
      %s2392 = sshll.u32 %s4, 4
      %s2393 = int_to_ptr.hbm [resolvable:$true] %s2392
      %2398 = dma.vmem_to_hbm [thread:$0]  %s2391, 256, %s2393, [#allocation4], 128, 128, 8
    $region33: #{lighting_encoder_forward.1} parent=1 // pred_fallthru
      _
    // Predicated region
    $region34: #{lighting_encoder_forward.1} parent=1 // pred_check
      _
    $region35: #{lighting_encoder_forward.1} parent=1 // pred_check_branch
      %2400 = sbr.rel (0) target = $region37
    $region36: #{lighting_encoder_forward.1} parent=1 // pred_region
      %2402 = dma.done [#allocation4], 256
    $region37: #{lighting_encoder_forward.1} parent=1 // pred_fallthru
      _
    %2403 = vsyncpa [#allocation3], 1
    %2404 = vsyncpa [#allocation6], 1
    %2405 = vsyncpa [#allocation4], 1

</llo_original>
